<compile_context>
chip_gen: v7x
topology: tpu7x:2x2x1
jax: 0.10.0
libtpu: 0.0.40
codegen_flags: <defaults>
</compile_context>

<pallas_src>
import jax
import jax.numpy as jnp
from jax.experimental import pallas as pl
from jax.experimental.pallas import tpu as pltpu


def _round_up(x, m):
    return ((x + m - 1) // m) * m


def lstm_kernel(x_ref, w_ref, b_ref, fcw_ref, fcb_ref, out_ref):
    """One kernel invocation = full LSTM over T timesteps for one batch block.

    x_ref  : (T, BB, Ep)   bf16, time-major embedded tokens (zero padded)
    w_ref  : (Ep+Hp, 4*Hp) bf16, fused [W_ih^T ; W_hh^T], gate order [i,f,g,o]
    b_ref  : (1, 4*Hp)     f32,  b_ih + b_hh (zero padded per gate)
    fcw_ref: (Hp, Cp)      bf16, fc weight transposed + padded
    fcb_ref: (1, Cp)       f32
    out_ref: (BB, Cp)      f32 logits (padded)
    """
    T = x_ref.shape[0]
    BB = x_ref.shape[1]
    Hp = fcw_ref.shape[0]

    # Hoist weight / bias loads out of the time loop.
    w = w_ref[...]          # (Ep+Hp, 4*Hp) bf16
    b = b_ref[...]          # (1, 4*Hp)     f32

    def step(t, carry):
        h, c = carry                                     # (BB, Hp) f32 each
        x_t = x_ref[t]                                   # (BB, Ep) bf16
        # Fused gate matmul: one MXU pass over K = Ep + Hp.
        xh = jnp.concatenate([x_t, h.astype(jnp.bfloat16)], axis=1)
        gates = jnp.dot(xh, w, preferred_element_type=jnp.float32) + b

        # Lane-aligned gate slices (Hp is a multiple of 128). f32 VPU/EUP math.
        i = jax.nn.sigmoid(gates[:, 0 * Hp:1 * Hp])
        f = jax.nn.sigmoid(gates[:, 1 * Hp:2 * Hp])
        g = jnp.tanh(gates[:, 2 * Hp:3 * Hp])
        o = jax.nn.sigmoid(gates[:, 3 * Hp:4 * Hp])

        c_new = f * c + i * g
        h_new = o * jnp.tanh(c_new)
        return h_new, c_new

    h0 = jnp.zeros((BB, Hp), jnp.float32)
    c0 = jnp.zeros((BB, Hp), jnp.float32)
    h_last, _ = jax.lax.fori_loop(0, T, step, (h0, c0), unroll=(T <= 16))

    # Final classifier on the last hidden state; lane-dense (Cp=128k) store.
    out_ref[...] = (
        jnp.dot(h_last.astype(jnp.bfloat16), fcw_ref[...],
                preferred_element_type=jnp.float32)
        + fcb_ref[...]
    )


def lstm_emotion_classifier(tokens, embedding, w_ih, w_hh, b_ih, b_hh,
                            fc_w, fc_b):
    """tokens: (B, T) int32.  Returns logits (B, C) float32.

    Weights are given in torch layout: w_ih (4H, E), w_hh (4H, H),
    b_ih/b_hh (4H,), fc_w (C, H), fc_b (C,). Gate order [i, f, g, o].
    """
    B, T = tokens.shape
    E = embedding.shape[1]
    H = w_hh.shape[1]          # torch (4H, H)
    C = fc_w.shape[0]          # torch (C, H)

    LANE, SUB = 128, 8
    Ep = _round_up(E, LANE)
    Hp = _round_up(H, LANE)
    Cp = _round_up(C, LANE)

    # Batch blocking: one block for small batches, 128-wide blocks for large
    # batches so the "parallel" grid axis can shard across TCs (v7x megacore).
    if B <= LANE:
        Bp = _round_up(B, SUB)
        BB = Bp
    else:
        Bp = _round_up(B, LANE)
        BB = LANE
    n_b = Bp // BB

    # ---- glue (plain JAX): embedding gather + padding + weight fusion ----
    x = embedding[tokens]                                  # (B, T, E) f32
    x = jnp.transpose(x, (1, 0, 2))                        # (T, B, E) time-major
    x = jnp.pad(x, ((0, 0), (0, Bp - B), (0, Ep - E))).astype(jnp.bfloat16)

    def pad_gate_cols(w):
        # w: (4H, K) torch layout -> (K, 4*Hp): transpose + zero-pad each gate's
        # H output columns up to Hp so kernel slices are lane-aligned.
        K = w.shape[1]
        w4 = w.reshape(4, H, K)
        w4 = jnp.pad(w4, ((0, 0), (0, Hp - H), (0, 0)))    # (4, Hp, K)
        return jnp.transpose(w4.reshape(4 * Hp, K))        # (K, 4*Hp)

    wih_t = jnp.pad(pad_gate_cols(w_ih), ((0, Ep - E), (0, 0)))   # (Ep, 4Hp)
    whh_t = jnp.pad(pad_gate_cols(w_hh), ((0, Hp - H), (0, 0)))   # (Hp, 4Hp)
    w_fused = jnp.concatenate([wih_t, whh_t], axis=0).astype(jnp.bfloat16)

    def pad_gate_bias(bv):
        b4 = jnp.pad(bv.reshape(4, H), ((0, 0), (0, Hp - H)))
        return b4.reshape(1, 4 * Hp)

    bias = (pad_gate_bias(b_ih) + pad_gate_bias(b_hh)).astype(jnp.float32)

    fcw_t = jnp.pad(jnp.transpose(fc_w),
                    ((0, Hp - H), (0, Cp - C))).astype(jnp.bfloat16)   # (Hp, Cp)
    fcb = jnp.pad(fc_b.reshape(1, -1),
                  ((0, 0), (0, Cp - C))).astype(jnp.float32)           # (1, Cp)

    out = pl.pallas_call(
        lstm_kernel,
        out_shape=jax.ShapeDtypeStruct((Bp, Cp), jnp.float32),
        grid_spec=pltpu.PrefetchScalarGridSpec(
            num_scalar_prefetch=0,
            grid=(n_b,),                                       # batch blocks
            in_specs=[
                pl.BlockSpec((T, BB, Ep), lambda b: (0, b, 0)),        # x slab
                pl.BlockSpec((Ep + Hp, 4 * Hp), lambda b: (0, 0)),     # fused W
                pl.BlockSpec((1, 4 * Hp), lambda b: (0, 0)),           # bias
                pl.BlockSpec((Hp, Cp), lambda b: (0, 0)),              # fc W^T
                pl.BlockSpec((1, Cp), lambda b: (0, 0)),               # fc b
            ],
            out_specs=pl.BlockSpec((BB, Cp), lambda b: (b, 0)),
        ),
        compiler_params=pltpu.CompilerParams(
            dimension_semantics=("parallel",),   # independent batch blocks
        ),
    )(x, w_fused, bias, fcw_t, fcb)

    return out[:B, :C]


def reference_forward(tokens, embedding, w_ih, w_hh, b_ih, b_hh, fc_w, fc_b):
    """Pure-JAX f32 reference replicating torch.nn.LSTM semantics."""
    x = embedding[tokens]                       # (B, T, E)
    B, T, E = x.shape
    H = w_hh.shape[1]

    def step(carry, x_t):
        h, c = carry
        gates = x_t @ w_ih.T + h @ w_hh.T + b_ih + b_hh
        i = jax.nn.sigmoid(gates[:, 0 * H:1 * H])
        f = jax.nn.sigmoid(gates[:, 1 * H:2 * H])
        g = jnp.tanh(gates[:, 2 * H:3 * H])
        o = jax.nn.sigmoid(gates[:, 3 * H:4 * H])
        c = f * c + i * g
        h = o * jnp.tanh(c)
        return (h, c), h

    h0 = jnp.zeros((B, H), jnp.float32)
    c0 = jnp.zeros((B, H), jnp.float32)
    (h_last, _), _ = jax.lax.scan(step, (h0, c0), jnp.transpose(x, (1, 0, 2)))
    return h_last @ fc_w.T + fc_b


if __name__ == "__main__":
    # Small, deterministic shapes consistent with the module.
    vocab_size, embed_dim, hidden_dim, num_classes = 32, 16, 32, 4
    batch, seq = 2, 8

    key = jax.random.PRNGKey(0)
    k_emb, k_wih, k_whh, k_bih, k_bhh, k_fcw, k_fcb, k_tok = jax.random.split(key, 8)

    scale = 0.1
    embedding = scale * jax.random.normal(k_emb, (vocab_size, embed_dim), jnp.float32)
    # padding_idx = 0 -> zero embedding row (as nn.Embedding(padding_idx=0))
    embedding = embedding.at[0].set(0.0)

    w_ih = scale * jax.random.normal(k_wih, (4 * hidden_dim, embed_dim), jnp.float32)
    w_hh = scale * jax.random.normal(k_whh, (4 * hidden_dim, hidden_dim), jnp.float32)
    b_ih = scale * jax.random.normal(k_bih, (4 * hidden_dim,), jnp.float32)
    b_hh = scale * jax.random.normal(k_bhh, (4 * hidden_dim,), jnp.float32)
    fc_w = scale * jax.random.normal(k_fcw, (num_classes, hidden_dim), jnp.float32)
    fc_b = scale * jax.random.normal(k_fcb, (num_classes,), jnp.float32)

    tokens = jax.random.randint(k_tok, (batch, seq), 0, vocab_size, jnp.int32)

    logits = lstm_emotion_classifier(tokens, embedding, w_ih, w_hh,
                                     b_ih, b_hh, fc_w, fc_b)
    jax.block_until_ready(logits)

    ref = reference_forward(tokens, embedding, w_ih, w_hh, b_ih, b_hh, fc_w, fc_b)
    assert logits.shape == (batch, num_classes)
    # bf16 matmul operands (f32 accumulation / state) -> small quantization
    # difference vs. the f32 reference; tolerance sized accordingly.
    max_err = float(jnp.max(jnp.abs(logits - ref)))
    assert max_err < 3e-2, (max_err, logits, ref)

    print("KERNEL_OK")
</pallas_src>

<mosaic_0001>
module attributes {stable_mosaic.version = 11 : i64} {
  func.func @lstm_kernel(%arg0: i32, %arg1: memref<8x8x128xbf16, #tpu.memory_space<vmem>>, %arg2: memref<256x512xbf16, #tpu.memory_space<vmem>>, %arg3: memref<1x512xf32, #tpu.memory_space<vmem>>, %arg4: memref<128x128xbf16, #tpu.memory_space<vmem>>, %arg5: memref<1x128xf32, #tpu.memory_space<vmem>>, %arg6: memref<8x128xf32, #tpu.memory_space<vmem>>) attributes {dimension_semantics = [#tpu.dimension_semantics<parallel>], iteration_bounds = array<i64: 1>, scalar_prefetch = 0 : i64, scratch_operands = 0 : i64, tpu.core_type = #tpu.core_type<tc>, window_params = [{transform_indices = @transform_0, window_bounds = array<i64: 8, 8, 128>}, {pipeline_mode = #tpu.pipeline_mode<synchronous>, transform_indices = @transform_1, window_bounds = array<i64: 256, 512>}, {pipeline_mode = #tpu.pipeline_mode<synchronous>, transform_indices = @transform_2, window_bounds = array<i64: 1, 512>}, {pipeline_mode = #tpu.pipeline_mode<synchronous>, transform_indices = @transform_3, window_bounds = array<i64: 128, 128>}, {pipeline_mode = #tpu.pipeline_mode<synchronous>, transform_indices = @transform_4, window_bounds = array<i64: 1, 128>}, {transform_indices = @transform_5, window_bounds = array<i64: 8, 128>}]} {
    %c0 = arith.constant 0 : index
    %c0_0 = arith.constant 0 : index
    %0 = vector.load %arg2[%c0, %c0_0] : memref<256x512xbf16, #tpu.memory_space<vmem>>, vector<256x512xbf16>
    %c0_1 = arith.constant 0 : index
    %c0_2 = arith.constant 0 : index
    %1 = vector.load %arg3[%c0_1, %c0_2] : memref<1x512xf32, #tpu.memory_space<vmem>>, vector<1x512xf32>
    %cst = arith.constant 0.000000e+00 : f32
    %2 = vector.broadcast %cst : f32 to vector<8x128xf32>
    %cst_3 = arith.constant 0.000000e+00 : f32
    %3 = vector.broadcast %cst_3 : f32 to vector<8x128xf32>
    %c0_i32 = arith.constant 0 : i32
    %4 = arith.index_cast %c0_i32 : i32 to index
    %c0_4 = arith.constant 0 : index
    %c0_5 = arith.constant 0 : index
    %5 = vector.load %arg1[%4, %c0_4, %c0_5] : memref<8x8x128xbf16, #tpu.memory_space<vmem>>, vector<1x8x128xbf16>
    %6 = vector.shape_cast %5 : vector<1x8x128xbf16> to vector<8x128xbf16>
    %7 = arith.truncf %2 : vector<8x128xf32> to vector<8x128xbf16>
    %8 = tpu.concatenate %6, %7 in 1 : vector<8x128xbf16>, vector<8x128xbf16> -> vector<8x256xbf16>
    %cst_6 = arith.constant dense<0.000000e+00> : vector<8x512xf32>
    %9 = tpu.matmul %8, %0, %cst_6 {dimension_numbers = #tpu.dot_dimension_numbers<[1], [0], [0], [1], [0, 0, 1, 1], [], []>} : vector<8x256xbf16>, vector<256x512xbf16>, vector<8x512xf32> -> vector<8x512xf32>
    %10 = vector.broadcast %1 : vector<1x512xf32> to vector<8x512xf32>
    %11 = arith.addf %9, %10 : vector<8x512xf32>
    %12 = vector.extract_strided_slice %11 {offsets = [0, 0], sizes = [8, 128], strides = [1, 1]} : vector<8x512xf32> to vector<8x128xf32>
    %13 = arith.negf %12 : vector<8x128xf32>
    %14 = math.exp %13 : vector<8x128xf32>
    %cst_7 = arith.constant 1.000000e+00 : f32
    %15 = vector.broadcast %cst_7 : f32 to vector<8x128xf32>
    %16 = arith.addf %15, %14 : vector<8x128xf32>
    %17 = arith.divf %15, %16 : vector<8x128xf32>
    %18 = vector.extract_strided_slice %11 {offsets = [0, 128], sizes = [8, 128], strides = [1, 1]} : vector<8x512xf32> to vector<8x128xf32>
    %19 = arith.negf %18 : vector<8x128xf32>
    %20 = math.exp %19 : vector<8x128xf32>
    %cst_8 = arith.constant 1.000000e+00 : f32
    %21 = vector.broadcast %cst_8 : f32 to vector<8x128xf32>
    %22 = arith.addf %21, %20 : vector<8x128xf32>
    %23 = arith.divf %21, %22 : vector<8x128xf32>
    %24 = vector.extract_strided_slice %11 {offsets = [0, 256], sizes = [8, 128], strides = [1, 1]} : vector<8x512xf32> to vector<8x128xf32>
    %25 = math.tanh %24 : vector<8x128xf32>
    %26 = vector.extract_strided_slice %11 {offsets = [0, 384], sizes = [8, 128], strides = [1, 1]} : vector<8x512xf32> to vector<8x128xf32>
    %27 = arith.negf %26 : vector<8x128xf32>
    %28 = math.exp %27 : vector<8x128xf32>
    %cst_9 = arith.constant 1.000000e+00 : f32
    %29 = vector.broadcast %cst_9 : f32 to vector<8x128xf32>
    %30 = arith.addf %29, %28 : vector<8x128xf32>
    %31 = arith.divf %29, %30 : vector<8x128xf32>
    %32 = arith.mulf %23, %3 : vector<8x128xf32>
    %33 = arith.mulf %17, %25 : vector<8x128xf32>
    %34 = arith.addf %32, %33 : vector<8x128xf32>
    %35 = math.tanh %34 : vector<8x128xf32>
    %36 = arith.mulf %31, %35 : vector<8x128xf32>
    %c1_i32 = arith.constant 1 : i32
    %37 = arith.index_cast %c1_i32 : i32 to index
    %c0_10 = arith.constant 0 : index
    %c0_11 = arith.constant 0 : index
    %38 = vector.load %arg1[%37, %c0_10, %c0_11] : memref<8x8x128xbf16, #tpu.memory_space<vmem>>, vector<1x8x128xbf16>
    %39 = vector.shape_cast %38 : vector<1x8x128xbf16> to vector<8x128xbf16>
    %40 = arith.truncf %36 : vector<8x128xf32> to vector<8x128xbf16>
    %41 = tpu.concatenate %39, %40 in 1 : vector<8x128xbf16>, vector<8x128xbf16> -> vector<8x256xbf16>
    %cst_12 = arith.constant dense<0.000000e+00> : vector<8x512xf32>
    %42 = tpu.matmul %41, %0, %cst_12 {dimension_numbers = #tpu.dot_dimension_numbers<[1], [0], [0], [1], [0, 0, 1, 1], [], []>} : vector<8x256xbf16>, vector<256x512xbf16>, vector<8x512xf32> -> vector<8x512xf32>
    %43 = vector.broadcast %1 : vector<1x512xf32> to vector<8x512xf32>
    %44 = arith.addf %42, %43 : vector<8x512xf32>
    %45 = vector.extract_strided_slice %44 {offsets = [0, 0], sizes = [8, 128], strides = [1, 1]} : vector<8x512xf32> to vector<8x128xf32>
    %46 = arith.negf %45 : vector<8x128xf32>
    %47 = math.exp %46 : vector<8x128xf32>
    %cst_13 = arith.constant 1.000000e+00 : f32
    %48 = vector.broadcast %cst_13 : f32 to vector<8x128xf32>
    %49 = arith.addf %48, %47 : vector<8x128xf32>
    %50 = arith.divf %48, %49 : vector<8x128xf32>
    %51 = vector.extract_strided_slice %44 {offsets = [0, 128], sizes = [8, 128], strides = [1, 1]} : vector<8x512xf32> to vector<8x128xf32>
    %52 = arith.negf %51 : vector<8x128xf32>
    %53 = math.exp %52 : vector<8x128xf32>
    %cst_14 = arith.constant 1.000000e+00 : f32
    %54 = vector.broadcast %cst_14 : f32 to vector<8x128xf32>
    %55 = arith.addf %54, %53 : vector<8x128xf32>
    %56 = arith.divf %54, %55 : vector<8x128xf32>
    %57 = vector.extract_strided_slice %44 {offsets = [0, 256], sizes = [8, 128], strides = [1, 1]} : vector<8x512xf32> to vector<8x128xf32>
    %58 = math.tanh %57 : vector<8x128xf32>
    %59 = vector.extract_strided_slice %44 {offsets = [0, 384], sizes = [8, 128], strides = [1, 1]} : vector<8x512xf32> to vector<8x128xf32>
    %60 = arith.negf %59 : vector<8x128xf32>
    %61 = math.exp %60 : vector<8x128xf32>
    %cst_15 = arith.constant 1.000000e+00 : f32
    %62 = vector.broadcast %cst_15 : f32 to vector<8x128xf32>
    %63 = arith.addf %62, %61 : vector<8x128xf32>
    %64 = arith.divf %62, %63 : vector<8x128xf32>
    %65 = arith.mulf %56, %34 : vector<8x128xf32>
    %66 = arith.mulf %50, %58 : vector<8x128xf32>
    %67 = arith.addf %65, %66 : vector<8x128xf32>
    %68 = math.tanh %67 : vector<8x128xf32>
    %69 = arith.mulf %64, %68 : vector<8x128xf32>
    %c2_i32 = arith.constant 2 : i32
    %70 = arith.index_cast %c2_i32 : i32 to index
    %c0_16 = arith.constant 0 : index
    %c0_17 = arith.constant 0 : index
    %71 = vector.load %arg1[%70, %c0_16, %c0_17] : memref<8x8x128xbf16, #tpu.memory_space<vmem>>, vector<1x8x128xbf16>
    %72 = vector.shape_cast %71 : vector<1x8x128xbf16> to vector<8x128xbf16>
    %73 = arith.truncf %69 : vector<8x128xf32> to vector<8x128xbf16>
    %74 = tpu.concatenate %72, %73 in 1 : vector<8x128xbf16>, vector<8x128xbf16> -> vector<8x256xbf16>
    %cst_18 = arith.constant dense<0.000000e+00> : vector<8x512xf32>
    %75 = tpu.matmul %74, %0, %cst_18 {dimension_numbers = #tpu.dot_dimension_numbers<[1], [0], [0], [1], [0, 0, 1, 1], [], []>} : vector<8x256xbf16>, vector<256x512xbf16>, vector<8x512xf32> -> vector<8x512xf32>
    %76 = vector.broadcast %1 : vector<1x512xf32> to vector<8x512xf32>
    %77 = arith.addf %75, %76 : vector<8x512xf32>
    %78 = vector.extract_strided_slice %77 {offsets = [0, 0], sizes = [8, 128], strides = [1, 1]} : vector<8x512xf32> to vector<8x128xf32>
    %79 = arith.negf %78 : vector<8x128xf32>
    %80 = math.exp %79 : vector<8x128xf32>
    %cst_19 = arith.constant 1.000000e+00 : f32
    %81 = vector.broadcast %cst_19 : f32 to vector<8x128xf32>
    %82 = arith.addf %81, %80 : vector<8x128xf32>
    %83 = arith.divf %81, %82 : vector<8x128xf32>
    %84 = vector.extract_strided_slice %77 {offsets = [0, 128], sizes = [8, 128], strides = [1, 1]} : vector<8x512xf32> to vector<8x128xf32>
    %85 = arith.negf %84 : vector<8x128xf32>
    %86 = math.exp %85 : vector<8x128xf32>
    %cst_20 = arith.constant 1.000000e+00 : f32
    %87 = vector.broadcast %cst_20 : f32 to vector<8x128xf32>
    %88 = arith.addf %87, %86 : vector<8x128xf32>
    %89 = arith.divf %87, %88 : vector<8x128xf32>
    %90 = vector.extract_strided_slice %77 {offsets = [0, 256], sizes = [8, 128], strides = [1, 1]} : vector<8x512xf32> to vector<8x128xf32>
    %91 = math.tanh %90 : vector<8x128xf32>
    %92 = vector.extract_strided_slice %77 {offsets = [0, 384], sizes = [8, 128], strides = [1, 1]} : vector<8x512xf32> to vector<8x128xf32>
    %93 = arith.negf %92 : vector<8x128xf32>
    %94 = math.exp %93 : vector<8x128xf32>
    %cst_21 = arith.constant 1.000000e+00 : f32
    %95 = vector.broadcast %cst_21 : f32 to vector<8x128xf32>
    %96 = arith.addf %95, %94 : vector<8x128xf32>
    %97 = arith.divf %95, %96 : vector<8x128xf32>
    %98 = arith.mulf %89, %67 : vector<8x128xf32>
    %99 = arith.mulf %83, %91 : vector<8x128xf32>
    %100 = arith.addf %98, %99 : vector<8x128xf32>
    %101 = math.tanh %100 : vector<8x128xf32>
    %102 = arith.mulf %97, %101 : vector<8x128xf32>
    %c3_i32 = arith.constant 3 : i32
    %103 = arith.index_cast %c3_i32 : i32 to index
    %c0_22 = arith.constant 0 : index
    %c0_23 = arith.constant 0 : index
    %104 = vector.load %arg1[%103, %c0_22, %c0_23] : memref<8x8x128xbf16, #tpu.memory_space<vmem>>, vector<1x8x128xbf16>
    %105 = vector.shape_cast %104 : vector<1x8x128xbf16> to vector<8x128xbf16>
    %106 = arith.truncf %102 : vector<8x128xf32> to vector<8x128xbf16>
    %107 = tpu.concatenate %105, %106 in 1 : vector<8x128xbf16>, vector<8x128xbf16> -> vector<8x256xbf16>
    %cst_24 = arith.constant dense<0.000000e+00> : vector<8x512xf32>
    %108 = tpu.matmul %107, %0, %cst_24 {dimension_numbers = #tpu.dot_dimension_numbers<[1], [0], [0], [1], [0, 0, 1, 1], [], []>} : vector<8x256xbf16>, vector<256x512xbf16>, vector<8x512xf32> -> vector<8x512xf32>
    %109 = vector.broadcast %1 : vector<1x512xf32> to vector<8x512xf32>
    %110 = arith.addf %108, %109 : vector<8x512xf32>
    %111 = vector.extract_strided_slice %110 {offsets = [0, 0], sizes = [8, 128], strides = [1, 1]} : vector<8x512xf32> to vector<8x128xf32>
    %112 = arith.negf %111 : vector<8x128xf32>
    %113 = math.exp %112 : vector<8x128xf32>
    %cst_25 = arith.constant 1.000000e+00 : f32
    %114 = vector.broadcast %cst_25 : f32 to vector<8x128xf32>
    %115 = arith.addf %114, %113 : vector<8x128xf32>
    %116 = arith.divf %114, %115 : vector<8x128xf32>
    %117 = vector.extract_strided_slice %110 {offsets = [0, 128], sizes = [8, 128], strides = [1, 1]} : vector<8x512xf32> to vector<8x128xf32>
    %118 = arith.negf %117 : vector<8x128xf32>
    %119 = math.exp %118 : vector<8x128xf32>
    %cst_26 = arith.constant 1.000000e+00 : f32
    %120 = vector.broadcast %cst_26 : f32 to vector<8x128xf32>
    %121 = arith.addf %120, %119 : vector<8x128xf32>
    %122 = arith.divf %120, %121 : vector<8x128xf32>
    %123 = vector.extract_strided_slice %110 {offsets = [0, 256], sizes = [8, 128], strides = [1, 1]} : vector<8x512xf32> to vector<8x128xf32>
    %124 = math.tanh %123 : vector<8x128xf32>
    %125 = vector.extract_strided_slice %110 {offsets = [0, 384], sizes = [8, 128], strides = [1, 1]} : vector<8x512xf32> to vector<8x128xf32>
    %126 = arith.negf %125 : vector<8x128xf32>
    %127 = math.exp %126 : vector<8x128xf32>
    %cst_27 = arith.constant 1.000000e+00 : f32
    %128 = vector.broadcast %cst_27 : f32 to vector<8x128xf32>
    %129 = arith.addf %128, %127 : vector<8x128xf32>
    %130 = arith.divf %128, %129 : vector<8x128xf32>
    %131 = arith.mulf %122, %100 : vector<8x128xf32>
    %132 = arith.mulf %116, %124 : vector<8x128xf32>
    %133 = arith.addf %131, %132 : vector<8x128xf32>
    %134 = math.tanh %133 : vector<8x128xf32>
    %135 = arith.mulf %130, %134 : vector<8x128xf32>
    %c4_i32 = arith.constant 4 : i32
    %136 = arith.index_cast %c4_i32 : i32 to index
    %c0_28 = arith.constant 0 : index
    %c0_29 = arith.constant 0 : index
    %137 = vector.load %arg1[%136, %c0_28, %c0_29] : memref<8x8x128xbf16, #tpu.memory_space<vmem>>, vector<1x8x128xbf16>
    %138 = vector.shape_cast %137 : vector<1x8x128xbf16> to vector<8x128xbf16>
    %139 = arith.truncf %135 : vector<8x128xf32> to vector<8x128xbf16>
    %140 = tpu.concatenate %138, %139 in 1 : vector<8x128xbf16>, vector<8x128xbf16> -> vector<8x256xbf16>
    %cst_30 = arith.constant dense<0.000000e+00> : vector<8x512xf32>
    %141 = tpu.matmul %140, %0, %cst_30 {dimension_numbers = #tpu.dot_dimension_numbers<[1], [0], [0], [1], [0, 0, 1, 1], [], []>} : vector<8x256xbf16>, vector<256x512xbf16>, vector<8x512xf32> -> vector<8x512xf32>
    %142 = vector.broadcast %1 : vector<1x512xf32> to vector<8x512xf32>
    %143 = arith.addf %141, %142 : vector<8x512xf32>
    %144 = vector.extract_strided_slice %143 {offsets = [0, 0], sizes = [8, 128], strides = [1, 1]} : vector<8x512xf32> to vector<8x128xf32>
    %145 = arith.negf %144 : vector<8x128xf32>
    %146 = math.exp %145 : vector<8x128xf32>
    %cst_31 = arith.constant 1.000000e+00 : f32
    %147 = vector.broadcast %cst_31 : f32 to vector<8x128xf32>
    %148 = arith.addf %147, %146 : vector<8x128xf32>
    %149 = arith.divf %147, %148 : vector<8x128xf32>
    %150 = vector.extract_strided_slice %143 {offsets = [0, 128], sizes = [8, 128], strides = [1, 1]} : vector<8x512xf32> to vector<8x128xf32>
    %151 = arith.negf %150 : vector<8x128xf32>
    %152 = math.exp %151 : vector<8x128xf32>
    %cst_32 = arith.constant 1.000000e+00 : f32
    %153 = vector.broadcast %cst_32 : f32 to vector<8x128xf32>
    %154 = arith.addf %153, %152 : vector<8x128xf32>
    %155 = arith.divf %153, %154 : vector<8x128xf32>
    %156 = vector.extract_strided_slice %143 {offsets = [0, 256], sizes = [8, 128], strides = [1, 1]} : vector<8x512xf32> to vector<8x128xf32>
    %157 = math.tanh %156 : vector<8x128xf32>
    %158 = vector.extract_strided_slice %143 {offsets = [0, 384], sizes = [8, 128], strides = [1, 1]} : vector<8x512xf32> to vector<8x128xf32>
    %159 = arith.negf %158 : vector<8x128xf32>
    %160 = math.exp %159 : vector<8x128xf32>
    %cst_33 = arith.constant 1.000000e+00 : f32
    %161 = vector.broadcast %cst_33 : f32 to vector<8x128xf32>
    %162 = arith.addf %161, %160 : vector<8x128xf32>
    %163 = arith.divf %161, %162 : vector<8x128xf32>
    %164 = arith.mulf %155, %133 : vector<8x128xf32>
    %165 = arith.mulf %149, %157 : vector<8x128xf32>
    %166 = arith.addf %164, %165 : vector<8x128xf32>
    %167 = math.tanh %166 : vector<8x128xf32>
    %168 = arith.mulf %163, %167 : vector<8x128xf32>
    %c5_i32 = arith.constant 5 : i32
    %169 = arith.index_cast %c5_i32 : i32 to index
    %c0_34 = arith.constant 0 : index
    %c0_35 = arith.constant 0 : index
    %170 = vector.load %arg1[%169, %c0_34, %c0_35] : memref<8x8x128xbf16, #tpu.memory_space<vmem>>, vector<1x8x128xbf16>
    %171 = vector.shape_cast %170 : vector<1x8x128xbf16> to vector<8x128xbf16>
    %172 = arith.truncf %168 : vector<8x128xf32> to vector<8x128xbf16>
    %173 = tpu.concatenate %171, %172 in 1 : vector<8x128xbf16>, vector<8x128xbf16> -> vector<8x256xbf16>
    %cst_36 = arith.constant dense<0.000000e+00> : vector<8x512xf32>
    %174 = tpu.matmul %173, %0, %cst_36 {dimension_numbers = #tpu.dot_dimension_numbers<[1], [0], [0], [1], [0, 0, 1, 1], [], []>} : vector<8x256xbf16>, vector<256x512xbf16>, vector<8x512xf32> -> vector<8x512xf32>
    %175 = vector.broadcast %1 : vector<1x512xf32> to vector<8x512xf32>
    %176 = arith.addf %174, %175 : vector<8x512xf32>
    %177 = vector.extract_strided_slice %176 {offsets = [0, 0], sizes = [8, 128], strides = [1, 1]} : vector<8x512xf32> to vector<8x128xf32>
    %178 = arith.negf %177 : vector<8x128xf32>
    %179 = math.exp %178 : vector<8x128xf32>
    %cst_37 = arith.constant 1.000000e+00 : f32
    %180 = vector.broadcast %cst_37 : f32 to vector<8x128xf32>
    %181 = arith.addf %180, %179 : vector<8x128xf32>
    %182 = arith.divf %180, %181 : vector<8x128xf32>
    %183 = vector.extract_strided_slice %176 {offsets = [0, 128], sizes = [8, 128], strides = [1, 1]} : vector<8x512xf32> to vector<8x128xf32>
    %184 = arith.negf %183 : vector<8x128xf32>
    %185 = math.exp %184 : vector<8x128xf32>
    %cst_38 = arith.constant 1.000000e+00 : f32
    %186 = vector.broadcast %cst_38 : f32 to vector<8x128xf32>
    %187 = arith.addf %186, %185 : vector<8x128xf32>
    %188 = arith.divf %186, %187 : vector<8x128xf32>
    %189 = vector.extract_strided_slice %176 {offsets = [0, 256], sizes = [8, 128], strides = [1, 1]} : vector<8x512xf32> to vector<8x128xf32>
    %190 = math.tanh %189 : vector<8x128xf32>
    %191 = vector.extract_strided_slice %176 {offsets = [0, 384], sizes = [8, 128], strides = [1, 1]} : vector<8x512xf32> to vector<8x128xf32>
    %192 = arith.negf %191 : vector<8x128xf32>
    %193 = math.exp %192 : vector<8x128xf32>
    %cst_39 = arith.constant 1.000000e+00 : f32
    %194 = vector.broadcast %cst_39 : f32 to vector<8x128xf32>
    %195 = arith.addf %194, %193 : vector<8x128xf32>
    %196 = arith.divf %194, %195 : vector<8x128xf32>
    %197 = arith.mulf %188, %166 : vector<8x128xf32>
    %198 = arith.mulf %182, %190 : vector<8x128xf32>
    %199 = arith.addf %197, %198 : vector<8x128xf32>
    %200 = math.tanh %199 : vector<8x128xf32>
    %201 = arith.mulf %196, %200 : vector<8x128xf32>
    %c6_i32 = arith.constant 6 : i32
    %202 = arith.index_cast %c6_i32 : i32 to index
    %c0_40 = arith.constant 0 : index
    %c0_41 = arith.constant 0 : index
    %203 = vector.load %arg1[%202, %c0_40, %c0_41] : memref<8x8x128xbf16, #tpu.memory_space<vmem>>, vector<1x8x128xbf16>
    %204 = vector.shape_cast %203 : vector<1x8x128xbf16> to vector<8x128xbf16>
    %205 = arith.truncf %201 : vector<8x128xf32> to vector<8x128xbf16>
    %206 = tpu.concatenate %204, %205 in 1 : vector<8x128xbf16>, vector<8x128xbf16> -> vector<8x256xbf16>
    %cst_42 = arith.constant dense<0.000000e+00> : vector<8x512xf32>
    %207 = tpu.matmul %206, %0, %cst_42 {dimension_numbers = #tpu.dot_dimension_numbers<[1], [0], [0], [1], [0, 0, 1, 1], [], []>} : vector<8x256xbf16>, vector<256x512xbf16>, vector<8x512xf32> -> vector<8x512xf32>
    %208 = vector.broadcast %1 : vector<1x512xf32> to vector<8x512xf32>
    %209 = arith.addf %207, %208 : vector<8x512xf32>
    %210 = vector.extract_strided_slice %209 {offsets = [0, 0], sizes = [8, 128], strides = [1, 1]} : vector<8x512xf32> to vector<8x128xf32>
    %211 = arith.negf %210 : vector<8x128xf32>
    %212 = math.exp %211 : vector<8x128xf32>
    %cst_43 = arith.constant 1.000000e+00 : f32
    %213 = vector.broadcast %cst_43 : f32 to vector<8x128xf32>
    %214 = arith.addf %213, %212 : vector<8x128xf32>
    %215 = arith.divf %213, %214 : vector<8x128xf32>
    %216 = vector.extract_strided_slice %209 {offsets = [0, 128], sizes = [8, 128], strides = [1, 1]} : vector<8x512xf32> to vector<8x128xf32>
    %217 = arith.negf %216 : vector<8x128xf32>
    %218 = math.exp %217 : vector<8x128xf32>
    %cst_44 = arith.constant 1.000000e+00 : f32
    %219 = vector.broadcast %cst_44 : f32 to vector<8x128xf32>
    %220 = arith.addf %219, %218 : vector<8x128xf32>
    %221 = arith.divf %219, %220 : vector<8x128xf32>
    %222 = vector.extract_strided_slice %209 {offsets = [0, 256], sizes = [8, 128], strides = [1, 1]} : vector<8x512xf32> to vector<8x128xf32>
    %223 = math.tanh %222 : vector<8x128xf32>
    %224 = vector.extract_strided_slice %209 {offsets = [0, 384], sizes = [8, 128], strides = [1, 1]} : vector<8x512xf32> to vector<8x128xf32>
    %225 = arith.negf %224 : vector<8x128xf32>
    %226 = math.exp %225 : vector<8x128xf32>
    %cst_45 = arith.constant 1.000000e+00 : f32
    %227 = vector.broadcast %cst_45 : f32 to vector<8x128xf32>
    %228 = arith.addf %227, %226 : vector<8x128xf32>
    %229 = arith.divf %227, %228 : vector<8x128xf32>
    %230 = arith.mulf %221, %199 : vector<8x128xf32>
    %231 = arith.mulf %215, %223 : vector<8x128xf32>
    %232 = arith.addf %230, %231 : vector<8x128xf32>
    %233 = math.tanh %232 : vector<8x128xf32>
    %234 = arith.mulf %229, %233 : vector<8x128xf32>
    %c7_i32 = arith.constant 7 : i32
    %235 = arith.index_cast %c7_i32 : i32 to index
    %c0_46 = arith.constant 0 : index
    %c0_47 = arith.constant 0 : index
    %236 = vector.load %arg1[%235, %c0_46, %c0_47] : memref<8x8x128xbf16, #tpu.memory_space<vmem>>, vector<1x8x128xbf16>
    %237 = vector.shape_cast %236 : vector<1x8x128xbf16> to vector<8x128xbf16>
    %238 = arith.truncf %234 : vector<8x128xf32> to vector<8x128xbf16>
    %239 = tpu.concatenate %237, %238 in 1 : vector<8x128xbf16>, vector<8x128xbf16> -> vector<8x256xbf16>
    %cst_48 = arith.constant dense<0.000000e+00> : vector<8x512xf32>
    %240 = tpu.matmul %239, %0, %cst_48 {dimension_numbers = #tpu.dot_dimension_numbers<[1], [0], [0], [1], [0, 0, 1, 1], [], []>} : vector<8x256xbf16>, vector<256x512xbf16>, vector<8x512xf32> -> vector<8x512xf32>
    %241 = vector.broadcast %1 : vector<1x512xf32> to vector<8x512xf32>
    %242 = arith.addf %240, %241 : vector<8x512xf32>
    %243 = vector.extract_strided_slice %242 {offsets = [0, 0], sizes = [8, 128], strides = [1, 1]} : vector<8x512xf32> to vector<8x128xf32>
    %244 = arith.negf %243 : vector<8x128xf32>
    %245 = math.exp %244 : vector<8x128xf32>
    %cst_49 = arith.constant 1.000000e+00 : f32
    %246 = vector.broadcast %cst_49 : f32 to vector<8x128xf32>
    %247 = arith.addf %246, %245 : vector<8x128xf32>
    %248 = arith.divf %246, %247 : vector<8x128xf32>
    %249 = vector.extract_strided_slice %242 {offsets = [0, 128], sizes = [8, 128], strides = [1, 1]} : vector<8x512xf32> to vector<8x128xf32>
    %250 = arith.negf %249 : vector<8x128xf32>
    %251 = math.exp %250 : vector<8x128xf32>
    %cst_50 = arith.constant 1.000000e+00 : f32
    %252 = vector.broadcast %cst_50 : f32 to vector<8x128xf32>
    %253 = arith.addf %252, %251 : vector<8x128xf32>
    %254 = arith.divf %252, %253 : vector<8x128xf32>
    %255 = vector.extract_strided_slice %242 {offsets = [0, 256], sizes = [8, 128], strides = [1, 1]} : vector<8x512xf32> to vector<8x128xf32>
    %256 = math.tanh %255 : vector<8x128xf32>
    %257 = vector.extract_strided_slice %242 {offsets = [0, 384], sizes = [8, 128], strides = [1, 1]} : vector<8x512xf32> to vector<8x128xf32>
    %258 = arith.negf %257 : vector<8x128xf32>
    %259 = math.exp %258 : vector<8x128xf32>
    %cst_51 = arith.constant 1.000000e+00 : f32
    %260 = vector.broadcast %cst_51 : f32 to vector<8x128xf32>
    %261 = arith.addf %260, %259 : vector<8x128xf32>
    %262 = arith.divf %260, %261 : vector<8x128xf32>
    %263 = arith.mulf %254, %232 : vector<8x128xf32>
    %264 = arith.mulf %248, %256 : vector<8x128xf32>
    %265 = arith.addf %263, %264 : vector<8x128xf32>
    %266 = math.tanh %265 : vector<8x128xf32>
    %267 = arith.mulf %262, %266 : vector<8x128xf32>
    %c8_i32 = arith.constant 8 : i32
    %268 = arith.truncf %267 : vector<8x128xf32> to vector<8x128xbf16>
    %c0_52 = arith.constant 0 : index
    %c0_53 = arith.constant 0 : index
    %269 = vector.load %arg4[%c0_52, %c0_53] : memref<128x128xbf16, #tpu.memory_space<vmem>>, vector<128x128xbf16>
    %cst_54 = arith.constant dense<0.000000e+00> : vector<8x128xf32>
    %270 = tpu.matmul %268, %269, %cst_54 {dimension_numbers = #tpu.dot_dimension_numbers<[1], [0], [0], [1], [0, 0, 1, 1], [], []>} : vector<8x128xbf16>, vector<128x128xbf16>, vector<8x128xf32> -> vector<8x128xf32>
    %c0_55 = arith.constant 0 : index
    %c0_56 = arith.constant 0 : index
    %271 = vector.load %arg5[%c0_55, %c0_56] : memref<1x128xf32, #tpu.memory_space<vmem>>, vector<1x128xf32>
    %272 = vector.broadcast %271 : vector<1x128xf32> to vector<8x128xf32>
    %273 = arith.addf %270, %272 : vector<8x128xf32>
    %c0_57 = arith.constant 0 : index
    %c0_58 = arith.constant 0 : index
    %274 = vector.load %arg6[%c0_57, %c0_58] : memref<8x128xf32, #tpu.memory_space<vmem>>, vector<8x128xf32>
    tpu.vector_store %arg6[%c0_57, %c0_58], %273 {strides = array<i32>} : memref<8x128xf32, #tpu.memory_space<vmem>>, vector<8x128xf32>,
    return
  }
  func.func @transform_0(%arg0: i32) -> (i32, i32, i32) {
    %c0_i32 = arith.constant 0 : i32
    %c0_i32_0 = arith.constant 0 : i32
    %c0_i32_1 = arith.constant 0 : i32
    return %c0_i32, %arg0, %c0_i32_0 : i32, i32, i32
  }
  func.func @transform_1(%arg0: i32) -> (i32, i32) {
    %c0_i32 = arith.constant 0 : i32
    %c0_i32_0 = arith.constant 0 : i32
    %c0_i32_1 = arith.constant 0 : i32
    return %c0_i32, %c0_i32_0 : i32, i32
  }
  func.func @transform_2(%arg0: i32) -> (i32, i32) {
    %c0_i32 = arith.constant 0 : i32
    %c0_i32_0 = arith.constant 0 : i32
    %c0_i32_1 = arith.constant 0 : i32
    return %c0_i32, %c0_i32_0 : i32, i32
  }
  func.func @transform_3(%arg0: i32) -> (i32, i32) {
    %c0_i32 = arith.constant 0 : i32
    %c0_i32_0 = arith.constant 0 : i32
    %c0_i32_1 = arith.constant 0 : i32
    return %c0_i32, %c0_i32_0 : i32, i32
  }
  func.func @transform_4(%arg0: i32) -> (i32, i32) {
    %c0_i32 = arith.constant 0 : i32
    %c0_i32_0 = arith.constant 0 : i32
    %c0_i32_1 = arith.constant 0 : i32
    return %c0_i32, %c0_i32_0 : i32, i32
  }
  func.func @transform_5(%arg0: i32) -> (i32, i32) {
    %c0_i32 = arith.constant 0 : i32
    %c0_i32_0 = arith.constant 0 : i32
    return %arg0, %c0_i32 : i32, i32
  }
}

</mosaic_0001>

<llo_original>
// kernel: tpu_custom_call.1
$region0: #{tpu_custom_call.1}
  #allocation0 [shape = 'u32[]', space=smem, size = 0x4, offset = 0x4, fixed_abs, tag = 'smem constant byte address 0x4 - core index']
  #allocation1 [shape = 'u32[144,128]{1,0:T(1,128)}', space=vmem, size = 0x12000, scoped, tag = 'internal scratch']
  %s0 = inlined_call_operand.hbm [shape: bf16[8,8,128], index: 0, kind: input, shape index: {}]
  %s1 = inlined_call_operand.hbm [shape: bf16[256,512], index: 1, kind: input, shape index: {}]
  %s2 = inlined_call_operand.vmem [shape: f32[1,512], index: 2, kind: input, shape index: {}]
  %s3 = inlined_call_operand.hbm [shape: bf16[128,128], index: 3, kind: input, shape index: {}]
  %s4 = inlined_call_operand.vmem [shape: f32[1,128], index: 4, kind: input, shape index: {}]
  %s5 = inlined_call_operand.hbm [shape: f32[8,128], index: 5, kind: output, shape index: {}]
  %s6 = sld [smem:[#allocation0]]
  $region42: #{tpu_custom_call.1} parent=0
    _
  %s8 = ssub.s32 1, %s6
  %s9 = scalar_select 0, %s8, %s6
  $region1: #{tpu_custom_call.1} parent=0
    #allocation2 [shape = 'u8[16384]{0}', space=vmem, size = 0x4000, scoped, tag = 'input window, operand 0, single buffered']
    #allocation3 [shape = 's32[1]{0}', space=sflag, size = 0x4, scoped, tag = 'scoped memory for tpu_custom_call.1']
    #allocation4 [shape = 's32[1]{0}', space=sflag, size = 0x4, scoped, tag = 'scoped memory for tpu_custom_call.1']
    #allocation5 [shape = 'u8[262144]{0}', space=vmem, size = 0x40000, scoped, tag = 'input window, operand 1, single buffered']
    #allocation6 [shape = 's32[1]{0}', space=sflag, size = 0x4, scoped, tag = 'scoped memory for tpu_custom_call.1']
    #allocation7 [shape = 'u8[32768]{0}', space=vmem, size = 0x8000, scoped, tag = 'input window, operand 3, single buffered']
    #allocation8 [shape = 'u8[4096]{0}', space=vmem, size = 0x1000, scoped, tag = 'output window, operand 0, single buffered']
    %10 = vsyncpa [#allocation3], 0
    %11 = vsyncpa [#allocation6], 0
    %12 = vsyncpa [#allocation4], 0
    // Predicated region
    $region2: #{tpu_custom_call.1} parent=1 // pred_check
      _
    $region3: #{tpu_custom_call.1} parent=1 // pred_check_branch
      %14 = sbr.rel (0) target = $region5
    $region4: #{tpu_custom_call.1} parent=1 // pred_region
      %s16 = ssub.s32 512, 512
      %17 = vsyncadd [#allocation3], %s16
      %s18 = sshll.u32 [#allocation2], 4
      %s19 = int_to_ptr.vmem [resolvable:$true] %s18
      %24 = dma.hbm_to_vmem [thread:$0]  %s0, 512, %s19, [#allocation3], 64, 64, 4
    $region5: #{tpu_custom_call.1} parent=1 // pred_fallthru
      _
    // Predicated region
    $region6: #{tpu_custom_call.1} parent=1 // pred_check
      _
    $region7: #{tpu_custom_call.1} parent=1 // pred_check_branch
      %26 = sbr.rel (0) target = $region9
    $region8: #{tpu_custom_call.1} parent=1 // pred_region
      %s28 = ssub.s32 8192, 8192
      %29 = vsyncadd [#allocation6], %s28
      %s30 = sshll.u32 [#allocation5], 4
      %s31 = int_to_ptr.vmem [resolvable:$true] %s30
      %36 = dma.hbm_to_vmem [thread:$0]  %s1, 8192, %s31, [#allocation6], 256, 256, 16
    $region9: #{tpu_custom_call.1} parent=1 // pred_fallthru
      _
    // Predicated region
    $region10: #{tpu_custom_call.1} parent=1 // pred_check
      _
    $region11: #{tpu_custom_call.1} parent=1 // pred_check_branch
      %38 = sbr.rel (0) target = $region13
    $region12: #{tpu_custom_call.1} parent=1 // pred_region
      _
    $region13: #{tpu_custom_call.1} parent=1 // pred_fallthru
      _
    // Predicated region
    $region14: #{tpu_custom_call.1} parent=1 // pred_check
      _
    $region15: #{tpu_custom_call.1} parent=1 // pred_check_branch
      %40 = sbr.rel (0) target = $region17
    $region16: #{tpu_custom_call.1} parent=1 // pred_region
      %s42 = ssub.s32 1024, 1024
      %43 = vsyncadd [#allocation6], %s42
      %s44 = sshll.u32 [#allocation7], 4
      %s45 = int_to_ptr.vmem [resolvable:$true] %s44
      %50 = dma.hbm_to_vmem [thread:$0]  %s3, 1024, %s45, [#allocation6], 64, 64, 4
    $region17: #{tpu_custom_call.1} parent=1 // pred_fallthru
      _
    // Predicated region
    $region18: #{tpu_custom_call.1} parent=1 // pred_check
      _
    $region19: #{tpu_custom_call.1} parent=1 // pred_check_branch
      %52 = sbr.rel (0) target = $region21
    $region20: #{tpu_custom_call.1} parent=1 // pred_region
      _
    $region21: #{tpu_custom_call.1} parent=1 // pred_fallthru
      _
    // Predicated region
    $region22: #{tpu_custom_call.1} parent=1 // pred_check
      _
    $region23: #{tpu_custom_call.1} parent=1 // pred_check_branch
      %54 = sbr.rel (0) target = $region25
    $region24: #{tpu_custom_call.1} parent=1 // pred_region
      %55 = dma.done [#allocation3], 512
    $region25: #{tpu_custom_call.1} parent=1 // pred_fallthru
      _
    // Predicated region
    $region26: #{tpu_custom_call.1} parent=1 // pred_check
      _
    $region27: #{tpu_custom_call.1} parent=1 // pred_check_branch
      %57 = sbr.rel (0) target = $region29
    $region28: #{tpu_custom_call.1} parent=1 // pred_region
      %58 = dma.done [#allocation6], 8192
    $region29: #{tpu_custom_call.1} parent=1 // pred_fallthru
      _
    // Predicated region
    $region30: #{tpu_custom_call.1} parent=1 // pred_check
      _
    $region31: #{tpu_custom_call.1} parent=1 // pred_check_branch
      %60 = sbr.rel (0) target = $region33
    $region32: #{tpu_custom_call.1} parent=1 // pred_region
      %61 = dma.done [#allocation6], 1024
    $region33: #{tpu_custom_call.1} parent=1 // pred_fallthru
      _
    %v63 = vld [vmem:[#allocation5] sm:$0xff]
    %v64 = vld [vmem:[#allocation5 + $0x8] sm:$0xff]
    %v65 = vld [vmem:[#allocation5 + $0x10] sm:$0xff]
    %v66 = vld [vmem:[#allocation5 + $0x18] sm:$0xff]
    %v67 = vld [vmem:[#allocation5 + $0x20] sm:$0xff]
    %v68 = vld [vmem:[#allocation5 + $0x28] sm:$0xff]
    %v69 = vld [vmem:[#allocation5 + $0x30] sm:$0xff]
    %v70 = vld [vmem:[#allocation5 + $0x38] sm:$0xff]
    %v71 = vld [vmem:[#allocation5 + $0x40] sm:$0xff]
    %v72 = vld [vmem:[#allocation5 + $0x48] sm:$0xff]
    %v73 = vld [vmem:[#allocation5 + $0x50] sm:$0xff]
    %v74 = vld [vmem:[#allocation5 + $0x58] sm:$0xff]
    %v75 = vld [vmem:[#allocation5 + $0x60] sm:$0xff]
    %v76 = vld [vmem:[#allocation5 + $0x68] sm:$0xff]
    %v77 = vld [vmem:[#allocation5 + $0x70] sm:$0xff]
    %v78 = vld [vmem:[#allocation5 + $0x78] sm:$0xff]
    %v79 = vld [vmem:[#allocation5 + $0x80] sm:$0xff]
    %v80 = vld [vmem:[#allocation5 + $0x88] sm:$0xff]
    %v81 = vld [vmem:[#allocation5 + $0x90] sm:$0xff]
    %v82 = vld [vmem:[#allocation5 + $0x98] sm:$0xff]
    %v83 = vld [vmem:[#allocation5 + $0xa0] sm:$0xff]
    %v84 = vld [vmem:[#allocation5 + $0xa8] sm:$0xff]
    %v85 = vld [vmem:[#allocation5 + $0xb0] sm:$0xff]
    %v86 = vld [vmem:[#allocation5 + $0xb8] sm:$0xff]
    %v87 = vld [vmem:[#allocation5 + $0xc0] sm:$0xff]
    %v88 = vld [vmem:[#allocation5 + $0xc8] sm:$0xff]
    %v89 = vld [vmem:[#allocation5 + $0xd0] sm:$0xff]
    %v90 = vld [vmem:[#allocation5 + $0xd8] sm:$0xff]
    %v91 = vld [vmem:[#allocation5 + $0xe0] sm:$0xff]
    %v92 = vld [vmem:[#allocation5 + $0xe8] sm:$0xff]
    %v93 = vld [vmem:[#allocation5 + $0xf0] sm:$0xff]
    %v94 = vld [vmem:[#allocation5 + $0xf8] sm:$0xff]
    %v95 = vld [vmem:[#allocation5 + $0x100] sm:$0xff]
    %v96 = vld [vmem:[#allocation5 + $0x108] sm:$0xff]
    %v97 = vld [vmem:[#allocation5 + $0x110] sm:$0xff]
    %v98 = vld [vmem:[#allocation5 + $0x118] sm:$0xff]
    %v99 = vld [vmem:[#allocation5 + $0x120] sm:$0xff]
    %v100 = vld [vmem:[#allocation5 + $0x128] sm:$0xff]
    %v101 = vld [vmem:[#allocation5 + $0x130] sm:$0xff]
    %v102 = vld [vmem:[#allocation5 + $0x138] sm:$0xff]
    %v103 = vld [vmem:[#allocation5 + $0x140] sm:$0xff]
    %v104 = vld [vmem:[#allocation5 + $0x148] sm:$0xff]
    %v105 = vld [vmem:[#allocation5 + $0x150] sm:$0xff]
    %v106 = vld [vmem:[#allocation5 + $0x158] sm:$0xff]
    %v107 = vld [vmem:[#allocation5 + $0x160] sm:$0xff]
    %v108 = vld [vmem:[#allocation5 + $0x168] sm:$0xff]
    %v109 = vld [vmem:[#allocation5 + $0x170] sm:$0xff]
    %v110 = vld [vmem:[#allocation5 + $0x178] sm:$0xff]
    %v111 = vld [vmem:[#allocation5 + $0x180] sm:$0xff]
    %v112 = vld [vmem:[#allocation5 + $0x188] sm:$0xff]
    %v113 = vld [vmem:[#allocation5 + $0x190] sm:$0xff]
    %v114 = vld [vmem:[#allocation5 + $0x198] sm:$0xff]
    %v115 = vld [vmem:[#allocation5 + $0x1a0] sm:$0xff]
    %v116 = vld [vmem:[#allocation5 + $0x1a8] sm:$0xff]
    %v117 = vld [vmem:[#allocation5 + $0x1b0] sm:$0xff]
    %v118 = vld [vmem:[#allocation5 + $0x1b8] sm:$0xff]
    %v119 = vld [vmem:[#allocation5 + $0x1c0] sm:$0xff]
    %v120 = vld [vmem:[#allocation5 + $0x1c8] sm:$0xff]
    %v121 = vld [vmem:[#allocation5 + $0x1d0] sm:$0xff]
    %v122 = vld [vmem:[#allocation5 + $0x1d8] sm:$0xff]
    %v123 = vld [vmem:[#allocation5 + $0x1e0] sm:$0xff]
    %v124 = vld [vmem:[#allocation5 + $0x1e8] sm:$0xff]
    %v125 = vld [vmem:[#allocation5 + $0x1f0] sm:$0xff]
    %v126 = vld [vmem:[#allocation5 + $0x1f8] sm:$0xff]
    %v127 = vld [vmem:[%s2] sm:$0xf]
    %v128 = vld [vmem:[#allocation2] sm:$0xf]
    %v130 = vlaneseq
    %v131 = vshrl.u32 %v130, 7
    %v132 = vsub.s32 0, %v131
    %v133 = vrot.slane %v127, %v132
    %v134 = vlaneseq
    %v135 = vshrl.u32 %v134, 7
    %v136 = vsub.s32 1, %v135
    %v137 = vrot.slane %v127, %v136
    %v138 = vlaneseq
    %v139 = vshrl.u32 %v138, 7
    %v140 = vsub.s32 2, %v139
    %v141 = vrot.slane %v127, %v140
    %v142 = vlaneseq
    %v143 = vshrl.u32 %v142, 7
    %v144 = vsub.s32 3, %v143
    %v145 = vrot.slane %v127, %v144
    %v214 = vunpack.c.l.b16 %v63
    %v215 = vunpack.c.h.b16 %v63
    %v216 = vunpack.c.l.b16 %v64
    %v217 = vunpack.c.h.b16 %v64
    %v218 = vunpack.c.l.b16 %v65
    %v219 = vunpack.c.h.b16 %v65
    %v220 = vunpack.c.l.b16 %v66
    %v221 = vunpack.c.h.b16 %v66
    %v222 = vunpack.c.l.b16 %v67
    %v223 = vunpack.c.h.b16 %v67
    %v224 = vunpack.c.l.b16 %v68
    %v225 = vunpack.c.h.b16 %v68
    %v226 = vunpack.c.l.b16 %v69
    %v227 = vunpack.c.h.b16 %v69
    %v228 = vunpack.c.l.b16 %v70
    %v229 = vunpack.c.h.b16 %v70
    %v230 = vunpack.c.l.b16 %v71
    %v231 = vunpack.c.h.b16 %v71
    %v232 = vunpack.c.l.b16 %v72
    %v233 = vunpack.c.h.b16 %v72
    %v234 = vunpack.c.l.b16 %v73
    %v235 = vunpack.c.h.b16 %v73
    %v236 = vunpack.c.l.b16 %v74
    %v237 = vunpack.c.h.b16 %v74
    %v238 = vunpack.c.l.b16 %v75
    %v239 = vunpack.c.h.b16 %v75
    %v240 = vunpack.c.l.b16 %v76
    %v241 = vunpack.c.h.b16 %v76
    %v242 = vunpack.c.l.b16 %v77
    %v243 = vunpack.c.h.b16 %v77
    %v244 = vunpack.c.l.b16 %v78
    %v245 = vunpack.c.h.b16 %v78
    %v246 = vunpack.c.l.b16 %v79
    %v247 = vunpack.c.h.b16 %v79
    %v248 = vunpack.c.l.b16 %v80
    %v249 = vunpack.c.h.b16 %v80
    %v250 = vunpack.c.l.b16 %v81
    %v251 = vunpack.c.h.b16 %v81
    %v252 = vunpack.c.l.b16 %v82
    %v253 = vunpack.c.h.b16 %v82
    %v254 = vunpack.c.l.b16 %v83
    %v255 = vunpack.c.h.b16 %v83
    %v256 = vunpack.c.l.b16 %v84
    %v257 = vunpack.c.h.b16 %v84
    %v258 = vunpack.c.l.b16 %v85
    %v259 = vunpack.c.h.b16 %v85
    %v260 = vunpack.c.l.b16 %v86
    %v261 = vunpack.c.h.b16 %v86
    %v262 = vunpack.c.l.b16 %v87
    %v263 = vunpack.c.h.b16 %v87
    %v264 = vunpack.c.l.b16 %v88
    %v265 = vunpack.c.h.b16 %v88
    %v266 = vunpack.c.l.b16 %v89
    %v267 = vunpack.c.h.b16 %v89
    %v268 = vunpack.c.l.b16 %v90
    %v269 = vunpack.c.h.b16 %v90
    %v270 = vunpack.c.l.b16 %v91
    %v271 = vunpack.c.h.b16 %v91
    %v272 = vunpack.c.l.b16 %v92
    %v273 = vunpack.c.h.b16 %v92
    %v274 = vunpack.c.l.b16 %v93
    %v275 = vunpack.c.h.b16 %v93
    %v276 = vunpack.c.l.b16 %v94
    %v277 = vunpack.c.h.b16 %v94
    %v278 = vunpack.c.l.b16 %v95
    %v279 = vunpack.c.h.b16 %v95
    %v280 = vunpack.c.l.b16 %v96
    %v281 = vunpack.c.h.b16 %v96
    %v282 = vunpack.c.l.b16 %v97
    %v283 = vunpack.c.h.b16 %v97
    %v284 = vunpack.c.l.b16 %v98
    %v285 = vunpack.c.h.b16 %v98
    %v286 = vunpack.c.l.b16 %v99
    %v287 = vunpack.c.h.b16 %v99
    %v288 = vunpack.c.l.b16 %v100
    %v289 = vunpack.c.h.b16 %v100
    %v290 = vunpack.c.l.b16 %v101
    %v291 = vunpack.c.h.b16 %v101
    %v292 = vunpack.c.l.b16 %v102
    %v293 = vunpack.c.h.b16 %v102
    %v294 = vunpack.c.l.b16 %v103
    %v295 = vunpack.c.h.b16 %v103
    %v296 = vunpack.c.l.b16 %v104
    %v297 = vunpack.c.h.b16 %v104
    %v298 = vunpack.c.l.b16 %v105
    %v299 = vunpack.c.h.b16 %v105
    %v300 = vunpack.c.l.b16 %v106
    %v301 = vunpack.c.h.b16 %v106
    %v302 = vunpack.c.l.b16 %v107
    %v303 = vunpack.c.h.b16 %v107
    %v304 = vunpack.c.l.b16 %v108
    %v305 = vunpack.c.h.b16 %v108
    %v306 = vunpack.c.l.b16 %v109
    %v307 = vunpack.c.h.b16 %v109
    %v308 = vunpack.c.l.b16 %v110
    %v309 = vunpack.c.h.b16 %v110
    %v310 = vunpack.c.l.b16 %v111
    %v311 = vunpack.c.h.b16 %v111
    %v312 = vunpack.c.l.b16 %v112
    %v313 = vunpack.c.h.b16 %v112
    %v314 = vunpack.c.l.b16 %v113
    %v315 = vunpack.c.h.b16 %v113
    %v316 = vunpack.c.l.b16 %v114
    %v317 = vunpack.c.h.b16 %v114
    %v318 = vunpack.c.l.b16 %v115
    %v319 = vunpack.c.h.b16 %v115
    %v320 = vunpack.c.l.b16 %v116
    %v321 = vunpack.c.h.b16 %v116
    %v322 = vunpack.c.l.b16 %v117
    %v323 = vunpack.c.h.b16 %v117
    %v324 = vunpack.c.l.b16 %v118
    %v325 = vunpack.c.h.b16 %v118
    %v326 = vunpack.c.l.b16 %v119
    %v327 = vunpack.c.h.b16 %v119
    %v328 = vunpack.c.l.b16 %v120
    %v329 = vunpack.c.h.b16 %v120
    %v330 = vunpack.c.l.b16 %v121
    %v331 = vunpack.c.h.b16 %v121
    %v332 = vunpack.c.l.b16 %v122
    %v333 = vunpack.c.h.b16 %v122
    %v334 = vunpack.c.l.b16 %v123
    %v335 = vunpack.c.h.b16 %v123
    %v336 = vunpack.c.l.b16 %v124
    %v337 = vunpack.c.h.b16 %v124
    %v338 = vunpack.c.l.b16 %v125
    %v339 = vunpack.c.h.b16 %v125
    %v340 = vunpack.c.l.b16 %v126
    %v341 = vunpack.c.h.b16 %v126
    %v342 = vpack.c.b16 %v218, %v214
    %v343 = vpack.c.b16 %v219, %v215
    %v344 = vpack.c.b16 %v220, %v216
    %v345 = vpack.c.b16 %v221, %v217
    %v346 = vpack.c.b16 %v226, %v222
    %v347 = vpack.c.b16 %v227, %v223
    %v348 = vpack.c.b16 %v228, %v224
    %v349 = vpack.c.b16 %v229, %v225
    %v350 = vpack.c.b16 %v234, %v230
    %v351 = vpack.c.b16 %v235, %v231
    %v352 = vpack.c.b16 %v236, %v232
    %v353 = vpack.c.b16 %v237, %v233
    %v354 = vpack.c.b16 %v242, %v238
    %v355 = vpack.c.b16 %v243, %v239
    %v356 = vpack.c.b16 %v244, %v240
    %v357 = vpack.c.b16 %v245, %v241
    %v358 = vpack.c.b16 %v250, %v246
    %v359 = vpack.c.b16 %v251, %v247
    %v360 = vpack.c.b16 %v252, %v248
    %v361 = vpack.c.b16 %v253, %v249
    %v362 = vpack.c.b16 %v258, %v254
    %v363 = vpack.c.b16 %v259, %v255
    %v364 = vpack.c.b16 %v260, %v256
    %v365 = vpack.c.b16 %v261, %v257
    %v366 = vpack.c.b16 %v266, %v262
    %v367 = vpack.c.b16 %v267, %v263
    %v368 = vpack.c.b16 %v268, %v264
    %v369 = vpack.c.b16 %v269, %v265
    %v370 = vpack.c.b16 %v274, %v270
    %v371 = vpack.c.b16 %v275, %v271
    %v372 = vpack.c.b16 %v276, %v272
    %v373 = vpack.c.b16 %v277, %v273
    %v374 = vpack.c.b16 %v282, %v278
    %v375 = vpack.c.b16 %v283, %v279
    %v376 = vpack.c.b16 %v284, %v280
    %v377 = vpack.c.b16 %v285, %v281
    %v378 = vpack.c.b16 %v290, %v286
    %v379 = vpack.c.b16 %v291, %v287
    %v380 = vpack.c.b16 %v292, %v288
    %v381 = vpack.c.b16 %v293, %v289
    %v382 = vpack.c.b16 %v298, %v294
    %v383 = vpack.c.b16 %v299, %v295
    %v384 = vpack.c.b16 %v300, %v296
    %v385 = vpack.c.b16 %v301, %v297
    %v386 = vpack.c.b16 %v306, %v302
    %v387 = vpack.c.b16 %v307, %v303
    %v388 = vpack.c.b16 %v308, %v304
    %v389 = vpack.c.b16 %v309, %v305
    %v390 = vpack.c.b16 %v314, %v310
    %v391 = vpack.c.b16 %v315, %v311
    %v392 = vpack.c.b16 %v316, %v312
    %v393 = vpack.c.b16 %v317, %v313
    %v394 = vpack.c.b16 %v322, %v318
    %v395 = vpack.c.b16 %v323, %v319
    %v396 = vpack.c.b16 %v324, %v320
    %v397 = vpack.c.b16 %v325, %v321
    %v398 = vpack.c.b16 %v330, %v326
    %v399 = vpack.c.b16 %v331, %v327
    %v400 = vpack.c.b16 %v332, %v328
    %v401 = vpack.c.b16 %v333, %v329
    %v402 = vpack.c.b16 %v338, %v334
    %v403 = vpack.c.b16 %v339, %v335
    %v404 = vpack.c.b16 %v340, %v336
    %v405 = vpack.c.b16 %v341, %v337
    %470 = vmatprep.subr.bf16.mxu0 %v343
    %471 = vmatpush1.bf16.msra.mxu0 %v342
    %472 = vmatprep.subr.bf16.mxu0 %v347
    %473 = vmatpush1.bf16.msra.mxu0 %v346
    %474 = vmatprep.subr.bf16.mxu0 %v351
    %475 = vmatpush1.bf16.msra.mxu0 %v350
    %476 = vmatprep.subr.bf16.mxu0 %v355
    %477 = vmatpush1.bf16.msra.mxu0 %v354
    %478 = vmatprep.subr.bf16.mxu0 %v359
    %479 = vmatpush1.bf16.msra.mxu0 %v358
    %480 = vmatprep.subr.bf16.mxu0 %v363
    %481 = vmatpush1.bf16.msra.mxu0 %v362
    %482 = vmatprep.subr.bf16.mxu0 %v367
    %483 = vmatpush1.bf16.msra.mxu0 %v366
    %484 = vmatprep.subr.bf16.mxu0 %v371
    %485 = vmatpush1.bf16.msra.mxu0 %v370
    %486 = vmatprep.subr.bf16.mxu0 %v375
    %487 = vmatpush1.bf16.msra.mxu0 %v374
    %488 = vmatprep.subr.bf16.mxu0 %v379
    %489 = vmatpush1.bf16.msra.mxu0 %v378
    %490 = vmatprep.subr.bf16.mxu0 %v383
    %491 = vmatpush1.bf16.msra.mxu0 %v382
    %492 = vmatprep.subr.bf16.mxu0 %v387
    %493 = vmatpush1.bf16.msra.mxu0 %v386
    %494 = vmatprep.subr.bf16.mxu0 %v391
    %495 = vmatpush1.bf16.msra.mxu0 %v390
    %496 = vmatprep.subr.bf16.mxu0 %v395
    %497 = vmatpush1.bf16.msra.mxu0 %v394
    %498 = vmatprep.subr.bf16.mxu0 %v399
    %499 = vmatpush1.bf16.msra.mxu0 %v398
    %500 = vmatprep.subr.bf16.mxu0 %v403
    %501 = vmatpush1.bf16.msra.mxu0 %v402
    %502 = vmatprep.mubr.bf16.mxu0 0
    %503 = vmatmul.mubr.bf16.gmra.mrb[0].mxu0 %v128
    %v504 = vpop.f32.mrb[0].mxu0
    %v505 = vadd.f32 %v133, %v504
    %v506 = vpop.f32.mrb[0].mxu0
    %v507 = vadd.f32 %v137, %v506
    %v508 = vpop.f32.mrb[0].mxu0
    %v509 = vpop.f32.mrb[0].mxu0
    %510 = vdwg.mxu0
    %511 = vmatprep.subr.bf16.mxu0 %v345
    %512 = vmatpush1.bf16.msra.mxu0 %v344
    %513 = vmatprep.subr.bf16.mxu0 %v349
    %514 = vmatpush1.bf16.msra.mxu0 %v348
    %515 = vmatprep.subr.bf16.mxu0 %v353
    %516 = vmatpush1.bf16.msra.mxu0 %v352
    %517 = vmatprep.subr.bf16.mxu0 %v357
    %518 = vmatpush1.bf16.msra.mxu0 %v356
    %519 = vmatprep.subr.bf16.mxu0 %v361
    %520 = vmatpush1.bf16.msra.mxu0 %v360
    %521 = vmatprep.subr.bf16.mxu0 %v365
    %522 = vmatpush1.bf16.msra.mxu0 %v364
    %523 = vmatprep.subr.bf16.mxu0 %v369
    %524 = vmatpush1.bf16.msra.mxu0 %v368
    %525 = vmatprep.subr.bf16.mxu0 %v373
    %526 = vmatpush1.bf16.msra.mxu0 %v372
    %527 = vmatprep.subr.bf16.mxu0 %v377
    %528 = vmatpush1.bf16.msra.mxu0 %v376
    %529 = vmatprep.subr.bf16.mxu0 %v381
    %530 = vmatpush1.bf16.msra.mxu0 %v380
    %531 = vmatprep.subr.bf16.mxu0 %v385
    %532 = vmatpush1.bf16.msra.mxu0 %v384
    %533 = vmatprep.subr.bf16.mxu0 %v389
    %534 = vmatpush1.bf16.msra.mxu0 %v388
    %535 = vmatprep.subr.bf16.mxu0 %v393
    %536 = vmatpush1.bf16.msra.mxu0 %v392
    %537 = vmatprep.subr.bf16.mxu0 %v397
    %538 = vmatpush1.bf16.msra.mxu0 %v396
    %539 = vmatprep.subr.bf16.mxu0 %v401
    %540 = vmatpush1.bf16.msra.mxu0 %v400
    %541 = vmatprep.subr.bf16.mxu0 %v405
    %542 = vmatpush1.bf16.msra.mxu0 %v404
    %543 = vmatprep.mubr.bf16.mxu0 0
    %544 = vmatmul.mubr.bf16.gmra.mrb[0].mxu0 %v128
    %v545 = vpop.f32.mrb[0].mxu0
    %v546 = vadd.f32 %v141, %v545
    %v547 = vpop.f32.mrb[0].mxu0
    %v548 = vadd.f32 %v145, %v547
    %v549 = vpop.f32.mrb[0].mxu0
    %v550 = vpop.f32.mrb[0].mxu0
    %551 = vdwg.mxu0
    %v552 = vxor.u32 %v505, 2147483648
    %v553 = vmul.f32 %v552, 1.442695
    %v554 = vpow.pop %v553
    %v555 = vadd.f32 %v554, 1.0
    %v556 = vrcp.pop %v555
    %v557 = vmul.f32 1.0, %v556
    %v558 = vxor.u32 %v507, 2147483648
    %v559 = vmul.f32 %v558, 1.442695
    %v560 = vpow.pop %v559
    %v561 = vadd.f32 %v560, 1.0
    %v562 = vrcp.pop %v561
    %v563 = vmul.f32 1.0, %v562
    %v564 = vtanh.pop %v546
    %v565 = vxor.u32 %v548, 2147483648
    %v566 = vmul.f32 %v565, 1.442695
    %v567 = vpow.pop %v566
    %v568 = vadd.f32 %v567, 1.0
    %v569 = vrcp.pop %v568
    %v570 = vmul.f32 1.0, %v569
    %v571 = vmul.f32 %v563, 0.0
    %v572 = vmul.f32 %v557, %v564
    %v573 = vadd.f32 %v571, %v572
    %v574 = vtanh.pop %v573
    %v575 = vmul.f32 %v570, %v574
    %s576 = scalar_lea.vmem [#allocation2], 4
    %v577 = vld [vmem:[%s576] sm:$0xf]
    %v578 = vpack.c.bf16 %v575, %v575
    %579 = vmatprep.subr.bf16.mxu0 %v343
    %580 = vmatpush1.bf16.msra.mxu0 %v342
    %581 = vmatprep.subr.bf16.mxu0 %v347
    %582 = vmatpush1.bf16.msra.mxu0 %v346
    %583 = vmatprep.subr.bf16.mxu0 %v351
    %584 = vmatpush1.bf16.msra.mxu0 %v350
    %585 = vmatprep.subr.bf16.mxu0 %v355
    %586 = vmatpush1.bf16.msra.mxu0 %v354
    %587 = vmatprep.subr.bf16.mxu0 %v359
    %588 = vmatpush1.bf16.msra.mxu0 %v358
    %589 = vmatprep.subr.bf16.mxu0 %v363
    %590 = vmatpush1.bf16.msra.mxu0 %v362
    %591 = vmatprep.subr.bf16.mxu0 %v367
    %592 = vmatpush1.bf16.msra.mxu0 %v366
    %593 = vmatprep.subr.bf16.mxu0 %v371
    %594 = vmatpush1.bf16.msra.mxu0 %v370
    %595 = vmatprep.subr.bf16.mxu0 %v375
    %596 = vmatpush1.bf16.msra.mxu0 %v374
    %597 = vmatprep.subr.bf16.mxu0 %v379
    %598 = vmatpush1.bf16.msra.mxu0 %v378
    %599 = vmatprep.subr.bf16.mxu0 %v383
    %600 = vmatpush1.bf16.msra.mxu0 %v382
    %601 = vmatprep.subr.bf16.mxu0 %v387
    %602 = vmatpush1.bf16.msra.mxu0 %v386
    %603 = vmatprep.subr.bf16.mxu0 %v391
    %604 = vmatpush1.bf16.msra.mxu0 %v390
    %605 = vmatprep.subr.bf16.mxu0 %v395
    %606 = vmatpush1.bf16.msra.mxu0 %v394
    %607 = vmatprep.subr.bf16.mxu0 %v399
    %608 = vmatpush1.bf16.msra.mxu0 %v398
    %609 = vmatprep.subr.bf16.mxu0 %v403
    %610 = vmatpush1.bf16.msra.mxu0 %v402
    %611 = vmatprep.mubr.bf16.mxu0 %v578
    %612 = vmatmul.mubr.bf16.gmra.mrb[0].mxu0 %v577
    %v613 = vpop.f32.mrb[0].mxu0
    %v614 = vadd.f32 %v133, %v613
    %v615 = vpop.f32.mrb[0].mxu0
    %v616 = vadd.f32 %v137, %v615
    %v617 = vpop.f32.mrb[0].mxu0
    %v618 = vpop.f32.mrb[0].mxu0
    %619 = vdwg.mxu0
    %620 = vmatprep.subr.bf16.mxu0 %v345
    %621 = vmatpush1.bf16.msra.mxu0 %v344
    %622 = vmatprep.subr.bf16.mxu0 %v349
    %623 = vmatpush1.bf16.msra.mxu0 %v348
    %624 = vmatprep.subr.bf16.mxu0 %v353
    %625 = vmatpush1.bf16.msra.mxu0 %v352
    %626 = vmatprep.subr.bf16.mxu0 %v357
    %627 = vmatpush1.bf16.msra.mxu0 %v356
    %628 = vmatprep.subr.bf16.mxu0 %v361
    %629 = vmatpush1.bf16.msra.mxu0 %v360
    %630 = vmatprep.subr.bf16.mxu0 %v365
    %631 = vmatpush1.bf16.msra.mxu0 %v364
    %632 = vmatprep.subr.bf16.mxu0 %v369
    %633 = vmatpush1.bf16.msra.mxu0 %v368
    %634 = vmatprep.subr.bf16.mxu0 %v373
    %635 = vmatpush1.bf16.msra.mxu0 %v372
    %636 = vmatprep.subr.bf16.mxu0 %v377
    %637 = vmatpush1.bf16.msra.mxu0 %v376
    %638 = vmatprep.subr.bf16.mxu0 %v381
    %639 = vmatpush1.bf16.msra.mxu0 %v380
    %640 = vmatprep.subr.bf16.mxu0 %v385
    %641 = vmatpush1.bf16.msra.mxu0 %v384
    %642 = vmatprep.subr.bf16.mxu0 %v389
    %643 = vmatpush1.bf16.msra.mxu0 %v388
    %644 = vmatprep.subr.bf16.mxu0 %v393
    %645 = vmatpush1.bf16.msra.mxu0 %v392
    %646 = vmatprep.subr.bf16.mxu0 %v397
    %647 = vmatpush1.bf16.msra.mxu0 %v396
    %648 = vmatprep.subr.bf16.mxu0 %v401
    %649 = vmatpush1.bf16.msra.mxu0 %v400
    %650 = vmatprep.subr.bf16.mxu0 %v405
    %651 = vmatpush1.bf16.msra.mxu0 %v404
    %652 = vmatprep.mubr.bf16.mxu0 %v578
    %653 = vmatmul.mubr.bf16.gmra.mrb[0].mxu0 %v577
    %v654 = vpop.f32.mrb[0].mxu0
    %v655 = vadd.f32 %v141, %v654
    %v656 = vpop.f32.mrb[0].mxu0
    %v657 = vadd.f32 %v145, %v656
    %v658 = vpop.f32.mrb[0].mxu0
    %v659 = vpop.f32.mrb[0].mxu0
    %660 = vdwg.mxu0
    %v661 = vxor.u32 %v614, 2147483648
    %v662 = vmul.f32 %v661, 1.442695
    %v663 = vpow.pop %v662
    %v664 = vadd.f32 %v663, 1.0
    %v665 = vrcp.pop %v664
    %v666 = vmul.f32 1.0, %v665
    %v667 = vxor.u32 %v616, 2147483648
    %v668 = vmul.f32 %v667, 1.442695
    %v669 = vpow.pop %v668
    %v670 = vadd.f32 %v669, 1.0
    %v671 = vrcp.pop %v670
    %v672 = vmul.f32 1.0, %v671
    %v673 = vtanh.pop %v655
    %v674 = vxor.u32 %v657, 2147483648
    %v675 = vmul.f32 %v674, 1.442695
    %v676 = vpow.pop %v675
    %v677 = vadd.f32 %v676, 1.0
    %v678 = vrcp.pop %v677
    %v679 = vmul.f32 1.0, %v678
    %v680 = vmul.f32 %v672, %v573
    %v681 = vmul.f32 %v666, %v673
    %v682 = vadd.f32 %v680, %v681
    %v683 = vtanh.pop %v682
    %v684 = vmul.f32 %v679, %v683
    %s685 = scalar_lea.vmem [#allocation2], 8
    %v686 = vld [vmem:[%s685] sm:$0xf]
    %v687 = vpack.c.bf16 %v684, %v684
    %688 = vmatprep.subr.bf16.mxu0 %v343
    %689 = vmatpush1.bf16.msra.mxu0 %v342
    %690 = vmatprep.subr.bf16.mxu0 %v347
    %691 = vmatpush1.bf16.msra.mxu0 %v346
    %692 = vmatprep.subr.bf16.mxu0 %v351
    %693 = vmatpush1.bf16.msra.mxu0 %v350
    %694 = vmatprep.subr.bf16.mxu0 %v355
    %695 = vmatpush1.bf16.msra.mxu0 %v354
    %696 = vmatprep.subr.bf16.mxu0 %v359
    %697 = vmatpush1.bf16.msra.mxu0 %v358
    %698 = vmatprep.subr.bf16.mxu0 %v363
    %699 = vmatpush1.bf16.msra.mxu0 %v362
    %700 = vmatprep.subr.bf16.mxu0 %v367
    %701 = vmatpush1.bf16.msra.mxu0 %v366
    %702 = vmatprep.subr.bf16.mxu0 %v371
    %703 = vmatpush1.bf16.msra.mxu0 %v370
    %704 = vmatprep.subr.bf16.mxu0 %v375
    %705 = vmatpush1.bf16.msra.mxu0 %v374
    %706 = vmatprep.subr.bf16.mxu0 %v379
    %707 = vmatpush1.bf16.msra.mxu0 %v378
    %708 = vmatprep.subr.bf16.mxu0 %v383
    %709 = vmatpush1.bf16.msra.mxu0 %v382
    %710 = vmatprep.subr.bf16.mxu0 %v387
    %711 = vmatpush1.bf16.msra.mxu0 %v386
    %712 = vmatprep.subr.bf16.mxu0 %v391
    %713 = vmatpush1.bf16.msra.mxu0 %v390
    %714 = vmatprep.subr.bf16.mxu0 %v395
    %715 = vmatpush1.bf16.msra.mxu0 %v394
    %716 = vmatprep.subr.bf16.mxu0 %v399
    %717 = vmatpush1.bf16.msra.mxu0 %v398
    %718 = vmatprep.subr.bf16.mxu0 %v403
    %719 = vmatpush1.bf16.msra.mxu0 %v402
    %720 = vmatprep.mubr.bf16.mxu0 %v687
    %721 = vmatmul.mubr.bf16.gmra.mrb[0].mxu0 %v686
    %v722 = vpop.f32.mrb[0].mxu0
    %v723 = vadd.f32 %v133, %v722
    %v724 = vpop.f32.mrb[0].mxu0
    %v725 = vadd.f32 %v137, %v724
    %v726 = vpop.f32.mrb[0].mxu0
    %v727 = vpop.f32.mrb[0].mxu0
    %728 = vdwg.mxu0
    %729 = vmatprep.subr.bf16.mxu0 %v345
    %730 = vmatpush1.bf16.msra.mxu0 %v344
    %731 = vmatprep.subr.bf16.mxu0 %v349
    %732 = vmatpush1.bf16.msra.mxu0 %v348
    %733 = vmatprep.subr.bf16.mxu0 %v353
    %734 = vmatpush1.bf16.msra.mxu0 %v352
    %735 = vmatprep.subr.bf16.mxu0 %v357
    %736 = vmatpush1.bf16.msra.mxu0 %v356
    %737 = vmatprep.subr.bf16.mxu0 %v361
    %738 = vmatpush1.bf16.msra.mxu0 %v360
    %739 = vmatprep.subr.bf16.mxu0 %v365
    %740 = vmatpush1.bf16.msra.mxu0 %v364
    %741 = vmatprep.subr.bf16.mxu0 %v369
    %742 = vmatpush1.bf16.msra.mxu0 %v368
    %743 = vmatprep.subr.bf16.mxu0 %v373
    %744 = vmatpush1.bf16.msra.mxu0 %v372
    %745 = vmatprep.subr.bf16.mxu0 %v377
    %746 = vmatpush1.bf16.msra.mxu0 %v376
    %747 = vmatprep.subr.bf16.mxu0 %v381
    %748 = vmatpush1.bf16.msra.mxu0 %v380
    %749 = vmatprep.subr.bf16.mxu0 %v385
    %750 = vmatpush1.bf16.msra.mxu0 %v384
    %751 = vmatprep.subr.bf16.mxu0 %v389
    %752 = vmatpush1.bf16.msra.mxu0 %v388
    %753 = vmatprep.subr.bf16.mxu0 %v393
    %754 = vmatpush1.bf16.msra.mxu0 %v392
    %755 = vmatprep.subr.bf16.mxu0 %v397
    %756 = vmatpush1.bf16.msra.mxu0 %v396
    %757 = vmatprep.subr.bf16.mxu0 %v401
    %758 = vmatpush1.bf16.msra.mxu0 %v400
    %759 = vmatprep.subr.bf16.mxu0 %v405
    %760 = vmatpush1.bf16.msra.mxu0 %v404
    %761 = vmatprep.mubr.bf16.mxu0 %v687
    %762 = vmatmul.mubr.bf16.gmra.mrb[0].mxu0 %v686
    %v763 = vpop.f32.mrb[0].mxu0
    %v764 = vadd.f32 %v141, %v763
    %v765 = vpop.f32.mrb[0].mxu0
    %v766 = vadd.f32 %v145, %v765
    %v767 = vpop.f32.mrb[0].mxu0
    %v768 = vpop.f32.mrb[0].mxu0
    %769 = vdwg.mxu0
    %v770 = vxor.u32 %v723, 2147483648
    %v771 = vmul.f32 %v770, 1.442695
    %v772 = vpow.pop %v771
    %v773 = vadd.f32 %v772, 1.0
    %v774 = vrcp.pop %v773
    %v775 = vmul.f32 1.0, %v774
    %v776 = vxor.u32 %v725, 2147483648
    %v777 = vmul.f32 %v776, 1.442695
    %v778 = vpow.pop %v777
    %v779 = vadd.f32 %v778, 1.0
    %v780 = vrcp.pop %v779
    %v781 = vmul.f32 1.0, %v780
    %v782 = vtanh.pop %v764
    %v783 = vxor.u32 %v766, 2147483648
    %v784 = vmul.f32 %v783, 1.442695
    %v785 = vpow.pop %v784
    %v786 = vadd.f32 %v785, 1.0
    %v787 = vrcp.pop %v786
    %v788 = vmul.f32 1.0, %v787
    %v789 = vmul.f32 %v781, %v682
    %v790 = vmul.f32 %v775, %v782
    %v791 = vadd.f32 %v789, %v790
    %v792 = vtanh.pop %v791
    %v793 = vmul.f32 %v788, %v792
    %s794 = scalar_lea.vmem [#allocation2], 12
    %v795 = vld [vmem:[%s794] sm:$0xf]
    %v796 = vpack.c.bf16 %v793, %v793
    %797 = vmatprep.subr.bf16.mxu0 %v343
    %798 = vmatpush1.bf16.msra.mxu0 %v342
    %799 = vmatprep.subr.bf16.mxu0 %v347
    %800 = vmatpush1.bf16.msra.mxu0 %v346
    %801 = vmatprep.subr.bf16.mxu0 %v351
    %802 = vmatpush1.bf16.msra.mxu0 %v350
    %803 = vmatprep.subr.bf16.mxu0 %v355
    %804 = vmatpush1.bf16.msra.mxu0 %v354
    %805 = vmatprep.subr.bf16.mxu0 %v359
    %806 = vmatpush1.bf16.msra.mxu0 %v358
    %807 = vmatprep.subr.bf16.mxu0 %v363
    %808 = vmatpush1.bf16.msra.mxu0 %v362
    %809 = vmatprep.subr.bf16.mxu0 %v367
    %810 = vmatpush1.bf16.msra.mxu0 %v366
    %811 = vmatprep.subr.bf16.mxu0 %v371
    %812 = vmatpush1.bf16.msra.mxu0 %v370
    %813 = vmatprep.subr.bf16.mxu0 %v375
    %814 = vmatpush1.bf16.msra.mxu0 %v374
    %815 = vmatprep.subr.bf16.mxu0 %v379
    %816 = vmatpush1.bf16.msra.mxu0 %v378
    %817 = vmatprep.subr.bf16.mxu0 %v383
    %818 = vmatpush1.bf16.msra.mxu0 %v382
    %819 = vmatprep.subr.bf16.mxu0 %v387
    %820 = vmatpush1.bf16.msra.mxu0 %v386
    %821 = vmatprep.subr.bf16.mxu0 %v391
    %822 = vmatpush1.bf16.msra.mxu0 %v390
    %823 = vmatprep.subr.bf16.mxu0 %v395
    %824 = vmatpush1.bf16.msra.mxu0 %v394
    %825 = vmatprep.subr.bf16.mxu0 %v399
    %826 = vmatpush1.bf16.msra.mxu0 %v398
    %827 = vmatprep.subr.bf16.mxu0 %v403
    %828 = vmatpush1.bf16.msra.mxu0 %v402
    %829 = vmatprep.mubr.bf16.mxu0 %v796
    %830 = vmatmul.mubr.bf16.gmra.mrb[0].mxu0 %v795
    %v831 = vpop.f32.mrb[0].mxu0
    %v832 = vadd.f32 %v133, %v831
    %v833 = vpop.f32.mrb[0].mxu0
    %v834 = vadd.f32 %v137, %v833
    %v835 = vpop.f32.mrb[0].mxu0
    %v836 = vpop.f32.mrb[0].mxu0
    %837 = vdwg.mxu0
    %838 = vmatprep.subr.bf16.mxu0 %v345
    %839 = vmatpush1.bf16.msra.mxu0 %v344
    %840 = vmatprep.subr.bf16.mxu0 %v349
    %841 = vmatpush1.bf16.msra.mxu0 %v348
    %842 = vmatprep.subr.bf16.mxu0 %v353
    %843 = vmatpush1.bf16.msra.mxu0 %v352
    %844 = vmatprep.subr.bf16.mxu0 %v357
    %845 = vmatpush1.bf16.msra.mxu0 %v356
    %846 = vmatprep.subr.bf16.mxu0 %v361
    %847 = vmatpush1.bf16.msra.mxu0 %v360
    %848 = vmatprep.subr.bf16.mxu0 %v365
    %849 = vmatpush1.bf16.msra.mxu0 %v364
    %850 = vmatprep.subr.bf16.mxu0 %v369
    %851 = vmatpush1.bf16.msra.mxu0 %v368
    %852 = vmatprep.subr.bf16.mxu0 %v373
    %853 = vmatpush1.bf16.msra.mxu0 %v372
    %854 = vmatprep.subr.bf16.mxu0 %v377
    %855 = vmatpush1.bf16.msra.mxu0 %v376
    %856 = vmatprep.subr.bf16.mxu0 %v381
    %857 = vmatpush1.bf16.msra.mxu0 %v380
    %858 = vmatprep.subr.bf16.mxu0 %v385
    %859 = vmatpush1.bf16.msra.mxu0 %v384
    %860 = vmatprep.subr.bf16.mxu0 %v389
    %861 = vmatpush1.bf16.msra.mxu0 %v388
    %862 = vmatprep.subr.bf16.mxu0 %v393
    %863 = vmatpush1.bf16.msra.mxu0 %v392
    %864 = vmatprep.subr.bf16.mxu0 %v397
    %865 = vmatpush1.bf16.msra.mxu0 %v396
    %866 = vmatprep.subr.bf16.mxu0 %v401
    %867 = vmatpush1.bf16.msra.mxu0 %v400
    %868 = vmatprep.subr.bf16.mxu0 %v405
    %869 = vmatpush1.bf16.msra.mxu0 %v404
    %870 = vmatprep.mubr.bf16.mxu0 %v796
    %871 = vmatmul.mubr.bf16.gmra.mrb[0].mxu0 %v795
    %v872 = vpop.f32.mrb[0].mxu0
    %v873 = vadd.f32 %v141, %v872
    %v874 = vpop.f32.mrb[0].mxu0
    %v875 = vadd.f32 %v145, %v874
    %v876 = vpop.f32.mrb[0].mxu0
    %v877 = vpop.f32.mrb[0].mxu0
    %878 = vdwg.mxu0
    %v879 = vxor.u32 %v832, 2147483648
    %v880 = vmul.f32 %v879, 1.442695
    %v881 = vpow.pop %v880
    %v882 = vadd.f32 %v881, 1.0
    %v883 = vrcp.pop %v882
    %v884 = vmul.f32 1.0, %v883
    %v885 = vxor.u32 %v834, 2147483648
    %v886 = vmul.f32 %v885, 1.442695
    %v887 = vpow.pop %v886
    %v888 = vadd.f32 %v887, 1.0
    %v889 = vrcp.pop %v888
    %v890 = vmul.f32 1.0, %v889
    %v891 = vtanh.pop %v873
    %v892 = vxor.u32 %v875, 2147483648
    %v893 = vmul.f32 %v892, 1.442695
    %v894 = vpow.pop %v893
    %v895 = vadd.f32 %v894, 1.0
    %v896 = vrcp.pop %v895
    %v897 = vmul.f32 1.0, %v896
    %v898 = vmul.f32 %v890, %v791
    %v899 = vmul.f32 %v884, %v891
    %v900 = vadd.f32 %v898, %v899
    %v901 = vtanh.pop %v900
    %v902 = vmul.f32 %v897, %v901
    %s903 = scalar_lea.vmem [#allocation2], 16
    %v904 = vld [vmem:[%s903] sm:$0xf]
    %v905 = vpack.c.bf16 %v902, %v902
    %906 = vmatprep.subr.bf16.mxu0 %v343
    %907 = vmatpush1.bf16.msra.mxu0 %v342
    %908 = vmatprep.subr.bf16.mxu0 %v347
    %909 = vmatpush1.bf16.msra.mxu0 %v346
    %910 = vmatprep.subr.bf16.mxu0 %v351
    %911 = vmatpush1.bf16.msra.mxu0 %v350
    %912 = vmatprep.subr.bf16.mxu0 %v355
    %913 = vmatpush1.bf16.msra.mxu0 %v354
    %914 = vmatprep.subr.bf16.mxu0 %v359
    %915 = vmatpush1.bf16.msra.mxu0 %v358
    %916 = vmatprep.subr.bf16.mxu0 %v363
    %917 = vmatpush1.bf16.msra.mxu0 %v362
    %918 = vmatprep.subr.bf16.mxu0 %v367
    %919 = vmatpush1.bf16.msra.mxu0 %v366
    %920 = vmatprep.subr.bf16.mxu0 %v371
    %921 = vmatpush1.bf16.msra.mxu0 %v370
    %922 = vmatprep.subr.bf16.mxu0 %v375
    %923 = vmatpush1.bf16.msra.mxu0 %v374
    %924 = vmatprep.subr.bf16.mxu0 %v379
    %925 = vmatpush1.bf16.msra.mxu0 %v378
    %926 = vmatprep.subr.bf16.mxu0 %v383
    %927 = vmatpush1.bf16.msra.mxu0 %v382
    %928 = vmatprep.subr.bf16.mxu0 %v387
    %929 = vmatpush1.bf16.msra.mxu0 %v386
    %930 = vmatprep.subr.bf16.mxu0 %v391
    %931 = vmatpush1.bf16.msra.mxu0 %v390
    %932 = vmatprep.subr.bf16.mxu0 %v395
    %933 = vmatpush1.bf16.msra.mxu0 %v394
    %934 = vmatprep.subr.bf16.mxu0 %v399
    %935 = vmatpush1.bf16.msra.mxu0 %v398
    %936 = vmatprep.subr.bf16.mxu0 %v403
    %937 = vmatpush1.bf16.msra.mxu0 %v402
    %938 = vmatprep.mubr.bf16.mxu0 %v905
    %939 = vmatmul.mubr.bf16.gmra.mrb[0].mxu0 %v904
    %v940 = vpop.f32.mrb[0].mxu0
    %v941 = vadd.f32 %v133, %v940
    %v942 = vpop.f32.mrb[0].mxu0
    %v943 = vadd.f32 %v137, %v942
    %v944 = vpop.f32.mrb[0].mxu0
    %v945 = vpop.f32.mrb[0].mxu0
    %946 = vdwg.mxu0
    %947 = vmatprep.subr.bf16.mxu0 %v345
    %948 = vmatpush1.bf16.msra.mxu0 %v344
    %949 = vmatprep.subr.bf16.mxu0 %v349
    %950 = vmatpush1.bf16.msra.mxu0 %v348
    %951 = vmatprep.subr.bf16.mxu0 %v353
    %952 = vmatpush1.bf16.msra.mxu0 %v352
    %953 = vmatprep.subr.bf16.mxu0 %v357
    %954 = vmatpush1.bf16.msra.mxu0 %v356
    %955 = vmatprep.subr.bf16.mxu0 %v361
    %956 = vmatpush1.bf16.msra.mxu0 %v360
    %957 = vmatprep.subr.bf16.mxu0 %v365
    %958 = vmatpush1.bf16.msra.mxu0 %v364
    %959 = vmatprep.subr.bf16.mxu0 %v369
    %960 = vmatpush1.bf16.msra.mxu0 %v368
    %961 = vmatprep.subr.bf16.mxu0 %v373
    %962 = vmatpush1.bf16.msra.mxu0 %v372
    %963 = vmatprep.subr.bf16.mxu0 %v377
    %964 = vmatpush1.bf16.msra.mxu0 %v376
    %965 = vmatprep.subr.bf16.mxu0 %v381
    %966 = vmatpush1.bf16.msra.mxu0 %v380
    %967 = vmatprep.subr.bf16.mxu0 %v385
    %968 = vmatpush1.bf16.msra.mxu0 %v384
    %969 = vmatprep.subr.bf16.mxu0 %v389
    %970 = vmatpush1.bf16.msra.mxu0 %v388
    %971 = vmatprep.subr.bf16.mxu0 %v393
    %972 = vmatpush1.bf16.msra.mxu0 %v392
    %973 = vmatprep.subr.bf16.mxu0 %v397
    %974 = vmatpush1.bf16.msra.mxu0 %v396
    %975 = vmatprep.subr.bf16.mxu0 %v401
    %976 = vmatpush1.bf16.msra.mxu0 %v400
    %977 = vmatprep.subr.bf16.mxu0 %v405
    %978 = vmatpush1.bf16.msra.mxu0 %v404
    %979 = vmatprep.mubr.bf16.mxu0 %v905
    %980 = vmatmul.mubr.bf16.gmra.mrb[0].mxu0 %v904
    %v981 = vpop.f32.mrb[0].mxu0
    %v982 = vadd.f32 %v141, %v981
    %v983 = vpop.f32.mrb[0].mxu0
    %v984 = vadd.f32 %v145, %v983
    %v985 = vpop.f32.mrb[0].mxu0
    %v986 = vpop.f32.mrb[0].mxu0
    %987 = vdwg.mxu0
    %v988 = vxor.u32 %v941, 2147483648
    %v989 = vmul.f32 %v988, 1.442695
    %v990 = vpow.pop %v989
    %v991 = vadd.f32 %v990, 1.0
    %v992 = vrcp.pop %v991
    %v993 = vmul.f32 1.0, %v992
    %v994 = vxor.u32 %v943, 2147483648
    %v995 = vmul.f32 %v994, 1.442695
    %v996 = vpow.pop %v995
    %v997 = vadd.f32 %v996, 1.0
    %v998 = vrcp.pop %v997
    %v999 = vmul.f32 1.0, %v998
    %v1000 = vtanh.pop %v982
    %v1001 = vxor.u32 %v984, 2147483648
    %v1002 = vmul.f32 %v1001, 1.442695
    %v1003 = vpow.pop %v1002
    %v1004 = vadd.f32 %v1003, 1.0
    %v1005 = vrcp.pop %v1004
    %v1006 = vmul.f32 1.0, %v1005
    %v1007 = vmul.f32 %v999, %v900
    %v1008 = vmul.f32 %v993, %v1000
    %v1009 = vadd.f32 %v1007, %v1008
    %v1010 = vtanh.pop %v1009
    %v1011 = vmul.f32 %v1006, %v1010
    %s1012 = scalar_lea.vmem [#allocation2], 20
    %v1013 = vld [vmem:[%s1012] sm:$0xf]
    %v1014 = vpack.c.bf16 %v1011, %v1011
    %1015 = vmatprep.subr.bf16.mxu0 %v343
    %1016 = vmatpush1.bf16.msra.mxu0 %v342
    %1017 = vmatprep.subr.bf16.mxu0 %v347
    %1018 = vmatpush1.bf16.msra.mxu0 %v346
    %1019 = vmatprep.subr.bf16.mxu0 %v351
    %1020 = vmatpush1.bf16.msra.mxu0 %v350
    %1021 = vmatprep.subr.bf16.mxu0 %v355
    %1022 = vmatpush1.bf16.msra.mxu0 %v354
    %1023 = vmatprep.subr.bf16.mxu0 %v359
    %1024 = vmatpush1.bf16.msra.mxu0 %v358
    %1025 = vmatprep.subr.bf16.mxu0 %v363
    %1026 = vmatpush1.bf16.msra.mxu0 %v362
    %1027 = vmatprep.subr.bf16.mxu0 %v367
    %1028 = vmatpush1.bf16.msra.mxu0 %v366
    %1029 = vmatprep.subr.bf16.mxu0 %v371
    %1030 = vmatpush1.bf16.msra.mxu0 %v370
    %1031 = vmatprep.subr.bf16.mxu0 %v375
    %1032 = vmatpush1.bf16.msra.mxu0 %v374
    %1033 = vmatprep.subr.bf16.mxu0 %v379
    %1034 = vmatpush1.bf16.msra.mxu0 %v378
    %1035 = vmatprep.subr.bf16.mxu0 %v383
    %1036 = vmatpush1.bf16.msra.mxu0 %v382
    %1037 = vmatprep.subr.bf16.mxu0 %v387
    %1038 = vmatpush1.bf16.msra.mxu0 %v386
    %1039 = vmatprep.subr.bf16.mxu0 %v391
    %1040 = vmatpush1.bf16.msra.mxu0 %v390
    %1041 = vmatprep.subr.bf16.mxu0 %v395
    %1042 = vmatpush1.bf16.msra.mxu0 %v394
    %1043 = vmatprep.subr.bf16.mxu0 %v399
    %1044 = vmatpush1.bf16.msra.mxu0 %v398
    %1045 = vmatprep.subr.bf16.mxu0 %v403
    %1046 = vmatpush1.bf16.msra.mxu0 %v402
    %1047 = vmatprep.mubr.bf16.mxu0 %v1014
    %1048 = vmatmul.mubr.bf16.gmra.mrb[0].mxu0 %v1013
    %v1049 = vpop.f32.mrb[0].mxu0
    %v1050 = vadd.f32 %v133, %v1049
    %v1051 = vpop.f32.mrb[0].mxu0
    %v1052 = vadd.f32 %v137, %v1051
    %v1053 = vpop.f32.mrb[0].mxu0
    %v1054 = vpop.f32.mrb[0].mxu0
    %1055 = vdwg.mxu0
    %1056 = vmatprep.subr.bf16.mxu0 %v345
    %1057 = vmatpush1.bf16.msra.mxu0 %v344
    %1058 = vmatprep.subr.bf16.mxu0 %v349
    %1059 = vmatpush1.bf16.msra.mxu0 %v348
    %1060 = vmatprep.subr.bf16.mxu0 %v353
    %1061 = vmatpush1.bf16.msra.mxu0 %v352
    %1062 = vmatprep.subr.bf16.mxu0 %v357
    %1063 = vmatpush1.bf16.msra.mxu0 %v356
    %1064 = vmatprep.subr.bf16.mxu0 %v361
    %1065 = vmatpush1.bf16.msra.mxu0 %v360
    %1066 = vmatprep.subr.bf16.mxu0 %v365
    %1067 = vmatpush1.bf16.msra.mxu0 %v364
    %1068 = vmatprep.subr.bf16.mxu0 %v369
    %1069 = vmatpush1.bf16.msra.mxu0 %v368
    %1070 = vmatprep.subr.bf16.mxu0 %v373
    %1071 = vmatpush1.bf16.msra.mxu0 %v372
    %1072 = vmatprep.subr.bf16.mxu0 %v377
    %1073 = vmatpush1.bf16.msra.mxu0 %v376
    %1074 = vmatprep.subr.bf16.mxu0 %v381
    %1075 = vmatpush1.bf16.msra.mxu0 %v380
    %1076 = vmatprep.subr.bf16.mxu0 %v385
    %1077 = vmatpush1.bf16.msra.mxu0 %v384
    %1078 = vmatprep.subr.bf16.mxu0 %v389
    %1079 = vmatpush1.bf16.msra.mxu0 %v388
    %1080 = vmatprep.subr.bf16.mxu0 %v393
    %1081 = vmatpush1.bf16.msra.mxu0 %v392
    %1082 = vmatprep.subr.bf16.mxu0 %v397
    %1083 = vmatpush1.bf16.msra.mxu0 %v396
    %1084 = vmatprep.subr.bf16.mxu0 %v401
    %1085 = vmatpush1.bf16.msra.mxu0 %v400
    %1086 = vmatprep.subr.bf16.mxu0 %v405
    %1087 = vmatpush1.bf16.msra.mxu0 %v404
    %1088 = vmatprep.mubr.bf16.mxu0 %v1014
    %1089 = vmatmul.mubr.bf16.gmra.mrb[0].mxu0 %v1013
    %v1090 = vpop.f32.mrb[0].mxu0
    %v1091 = vadd.f32 %v141, %v1090
    %v1092 = vpop.f32.mrb[0].mxu0
    %v1093 = vadd.f32 %v145, %v1092
    %v1094 = vpop.f32.mrb[0].mxu0
    %v1095 = vpop.f32.mrb[0].mxu0
    %1096 = vdwg.mxu0
    %v1097 = vxor.u32 %v1050, 2147483648
    %v1098 = vmul.f32 %v1097, 1.442695
    %v1099 = vpow.pop %v1098
    %v1100 = vadd.f32 %v1099, 1.0
    %v1101 = vrcp.pop %v1100
    %v1102 = vmul.f32 1.0, %v1101
    %v1103 = vxor.u32 %v1052, 2147483648
    %v1104 = vmul.f32 %v1103, 1.442695
    %v1105 = vpow.pop %v1104
    %v1106 = vadd.f32 %v1105, 1.0
    %v1107 = vrcp.pop %v1106
    %v1108 = vmul.f32 1.0, %v1107
    %v1109 = vtanh.pop %v1091
    %v1110 = vxor.u32 %v1093, 2147483648
    %v1111 = vmul.f32 %v1110, 1.442695
    %v1112 = vpow.pop %v1111
    %v1113 = vadd.f32 %v1112, 1.0
    %v1114 = vrcp.pop %v1113
    %v1115 = vmul.f32 1.0, %v1114
    %v1116 = vmul.f32 %v1108, %v1009
    %v1117 = vmul.f32 %v1102, %v1109
    %v1118 = vadd.f32 %v1116, %v1117
    %v1119 = vtanh.pop %v1118
    %v1120 = vmul.f32 %v1115, %v1119
    %s1121 = scalar_lea.vmem [#allocation2], 24
    %v1122 = vld [vmem:[%s1121] sm:$0xf]
    %v1123 = vpack.c.bf16 %v1120, %v1120
    %1124 = vmatprep.subr.bf16.mxu0 %v343
    %1125 = vmatpush1.bf16.msra.mxu0 %v342
    %1126 = vmatprep.subr.bf16.mxu0 %v347
    %1127 = vmatpush1.bf16.msra.mxu0 %v346
    %1128 = vmatprep.subr.bf16.mxu0 %v351
    %1129 = vmatpush1.bf16.msra.mxu0 %v350
    %1130 = vmatprep.subr.bf16.mxu0 %v355
    %1131 = vmatpush1.bf16.msra.mxu0 %v354
    %1132 = vmatprep.subr.bf16.mxu0 %v359
    %1133 = vmatpush1.bf16.msra.mxu0 %v358
    %1134 = vmatprep.subr.bf16.mxu0 %v363
    %1135 = vmatpush1.bf16.msra.mxu0 %v362
    %1136 = vmatprep.subr.bf16.mxu0 %v367
    %1137 = vmatpush1.bf16.msra.mxu0 %v366
    %1138 = vmatprep.subr.bf16.mxu0 %v371
    %1139 = vmatpush1.bf16.msra.mxu0 %v370
    %1140 = vmatprep.subr.bf16.mxu0 %v375
    %1141 = vmatpush1.bf16.msra.mxu0 %v374
    %1142 = vmatprep.subr.bf16.mxu0 %v379
    %1143 = vmatpush1.bf16.msra.mxu0 %v378
    %1144 = vmatprep.subr.bf16.mxu0 %v383
    %1145 = vmatpush1.bf16.msra.mxu0 %v382
    %1146 = vmatprep.subr.bf16.mxu0 %v387
    %1147 = vmatpush1.bf16.msra.mxu0 %v386
    %1148 = vmatprep.subr.bf16.mxu0 %v391
    %1149 = vmatpush1.bf16.msra.mxu0 %v390
    %1150 = vmatprep.subr.bf16.mxu0 %v395
    %1151 = vmatpush1.bf16.msra.mxu0 %v394
    %1152 = vmatprep.subr.bf16.mxu0 %v399
    %1153 = vmatpush1.bf16.msra.mxu0 %v398
    %1154 = vmatprep.subr.bf16.mxu0 %v403
    %1155 = vmatpush1.bf16.msra.mxu0 %v402
    %1156 = vmatprep.mubr.bf16.mxu0 %v1123
    %1157 = vmatmul.mubr.bf16.gmra.mrb[0].mxu0 %v1122
    %v1158 = vpop.f32.mrb[0].mxu0
    %v1159 = vadd.f32 %v133, %v1158
    %v1160 = vpop.f32.mrb[0].mxu0
    %v1161 = vadd.f32 %v137, %v1160
    %v1162 = vpop.f32.mrb[0].mxu0
    %v1163 = vpop.f32.mrb[0].mxu0
    %1164 = vdwg.mxu0
    %1165 = vmatprep.subr.bf16.mxu0 %v345
    %1166 = vmatpush1.bf16.msra.mxu0 %v344
    %1167 = vmatprep.subr.bf16.mxu0 %v349
    %1168 = vmatpush1.bf16.msra.mxu0 %v348
    %1169 = vmatprep.subr.bf16.mxu0 %v353
    %1170 = vmatpush1.bf16.msra.mxu0 %v352
    %1171 = vmatprep.subr.bf16.mxu0 %v357
    %1172 = vmatpush1.bf16.msra.mxu0 %v356
    %1173 = vmatprep.subr.bf16.mxu0 %v361
    %1174 = vmatpush1.bf16.msra.mxu0 %v360
    %1175 = vmatprep.subr.bf16.mxu0 %v365
    %1176 = vmatpush1.bf16.msra.mxu0 %v364
    %1177 = vmatprep.subr.bf16.mxu0 %v369
    %1178 = vmatpush1.bf16.msra.mxu0 %v368
    %1179 = vmatprep.subr.bf16.mxu0 %v373
    %1180 = vmatpush1.bf16.msra.mxu0 %v372
    %1181 = vmatprep.subr.bf16.mxu0 %v377
    %1182 = vmatpush1.bf16.msra.mxu0 %v376
    %1183 = vmatprep.subr.bf16.mxu0 %v381
    %1184 = vmatpush1.bf16.msra.mxu0 %v380
    %1185 = vmatprep.subr.bf16.mxu0 %v385
    %1186 = vmatpush1.bf16.msra.mxu0 %v384
    %1187 = vmatprep.subr.bf16.mxu0 %v389
    %1188 = vmatpush1.bf16.msra.mxu0 %v388
    %1189 = vmatprep.subr.bf16.mxu0 %v393
    %1190 = vmatpush1.bf16.msra.mxu0 %v392
    %1191 = vmatprep.subr.bf16.mxu0 %v397
    %1192 = vmatpush1.bf16.msra.mxu0 %v396
    %1193 = vmatprep.subr.bf16.mxu0 %v401
    %1194 = vmatpush1.bf16.msra.mxu0 %v400
    %1195 = vmatprep.subr.bf16.mxu0 %v405
    %1196 = vmatpush1.bf16.msra.mxu0 %v404
    %1197 = vmatprep.mubr.bf16.mxu0 %v1123
    %1198 = vmatmul.mubr.bf16.gmra.mrb[0].mxu0 %v1122
    %v1199 = vpop.f32.mrb[0].mxu0
    %v1200 = vadd.f32 %v141, %v1199
    %v1201 = vpop.f32.mrb[0].mxu0
    %v1202 = vadd.f32 %v145, %v1201
    %v1203 = vpop.f32.mrb[0].mxu0
    %v1204 = vpop.f32.mrb[0].mxu0
    %1205 = vdwg.mxu0
    %v1206 = vxor.u32 %v1159, 2147483648
    %v1207 = vmul.f32 %v1206, 1.442695
    %v1208 = vpow.pop %v1207
    %v1209 = vadd.f32 %v1208, 1.0
    %v1210 = vrcp.pop %v1209
    %v1211 = vmul.f32 1.0, %v1210
    %v1212 = vxor.u32 %v1161, 2147483648
    %v1213 = vmul.f32 %v1212, 1.442695
    %v1214 = vpow.pop %v1213
    %v1215 = vadd.f32 %v1214, 1.0
    %v1216 = vrcp.pop %v1215
    %v1217 = vmul.f32 1.0, %v1216
    %v1218 = vtanh.pop %v1200
    %v1219 = vxor.u32 %v1202, 2147483648
    %v1220 = vmul.f32 %v1219, 1.442695
    %v1221 = vpow.pop %v1220
    %v1222 = vadd.f32 %v1221, 1.0
    %v1223 = vrcp.pop %v1222
    %v1224 = vmul.f32 1.0, %v1223
    %v1225 = vmul.f32 %v1217, %v1118
    %v1226 = vmul.f32 %v1211, %v1218
    %v1227 = vadd.f32 %v1225, %v1226
    %v1228 = vtanh.pop %v1227
    %v1229 = vmul.f32 %v1224, %v1228
    %s1230 = scalar_lea.vmem [#allocation2], 28
    %v1231 = vld [vmem:[%s1230] sm:$0xf]
    %v1232 = vpack.c.bf16 %v1229, %v1229
    %1233 = vmatprep.subr.bf16.mxu0 %v343
    %1234 = vmatpush1.bf16.msra.mxu0 %v342
    %1235 = vmatprep.subr.bf16.mxu0 %v347
    %1236 = vmatpush1.bf16.msra.mxu0 %v346
    %1237 = vmatprep.subr.bf16.mxu0 %v351
    %1238 = vmatpush1.bf16.msra.mxu0 %v350
    %1239 = vmatprep.subr.bf16.mxu0 %v355
    %1240 = vmatpush1.bf16.msra.mxu0 %v354
    %1241 = vmatprep.subr.bf16.mxu0 %v359
    %1242 = vmatpush1.bf16.msra.mxu0 %v358
    %1243 = vmatprep.subr.bf16.mxu0 %v363
    %1244 = vmatpush1.bf16.msra.mxu0 %v362
    %1245 = vmatprep.subr.bf16.mxu0 %v367
    %1246 = vmatpush1.bf16.msra.mxu0 %v366
    %1247 = vmatprep.subr.bf16.mxu0 %v371
    %1248 = vmatpush1.bf16.msra.mxu0 %v370
    %1249 = vmatprep.subr.bf16.mxu0 %v375
    %1250 = vmatpush1.bf16.msra.mxu0 %v374
    %1251 = vmatprep.subr.bf16.mxu0 %v379
    %1252 = vmatpush1.bf16.msra.mxu0 %v378
    %1253 = vmatprep.subr.bf16.mxu0 %v383
    %1254 = vmatpush1.bf16.msra.mxu0 %v382
    %1255 = vmatprep.subr.bf16.mxu0 %v387
    %1256 = vmatpush1.bf16.msra.mxu0 %v386
    %1257 = vmatprep.subr.bf16.mxu0 %v391
    %1258 = vmatpush1.bf16.msra.mxu0 %v390
    %1259 = vmatprep.subr.bf16.mxu0 %v395
    %1260 = vmatpush1.bf16.msra.mxu0 %v394
    %1261 = vmatprep.subr.bf16.mxu0 %v399
    %1262 = vmatpush1.bf16.msra.mxu0 %v398
    %1263 = vmatprep.subr.bf16.mxu0 %v403
    %1264 = vmatpush1.bf16.msra.mxu0 %v402
    %1265 = vmatprep.mubr.bf16.mxu0 %v1232
    %1266 = vmatmul.mubr.bf16.gmra.mrb[0].mxu0 %v1231
    %v1267 = vpop.f32.mrb[0].mxu0
    %v1268 = vadd.f32 %v133, %v1267
    %v1269 = vpop.f32.mrb[0].mxu0
    %v1270 = vadd.f32 %v137, %v1269
    %v1271 = vpop.f32.mrb[0].mxu0
    %v1272 = vpop.f32.mrb[0].mxu0
    %1273 = vdwg.mxu0
    %1274 = vmatprep.subr.bf16.mxu0 %v345
    %1275 = vmatpush1.bf16.msra.mxu0 %v344
    %1276 = vmatprep.subr.bf16.mxu0 %v349
    %1277 = vmatpush1.bf16.msra.mxu0 %v348
    %1278 = vmatprep.subr.bf16.mxu0 %v353
    %1279 = vmatpush1.bf16.msra.mxu0 %v352
    %1280 = vmatprep.subr.bf16.mxu0 %v357
    %1281 = vmatpush1.bf16.msra.mxu0 %v356
    %1282 = vmatprep.subr.bf16.mxu0 %v361
    %1283 = vmatpush1.bf16.msra.mxu0 %v360
    %1284 = vmatprep.subr.bf16.mxu0 %v365
    %1285 = vmatpush1.bf16.msra.mxu0 %v364
    %1286 = vmatprep.subr.bf16.mxu0 %v369
    %1287 = vmatpush1.bf16.msra.mxu0 %v368
    %1288 = vmatprep.subr.bf16.mxu0 %v373
    %1289 = vmatpush1.bf16.msra.mxu0 %v372
    %1290 = vmatprep.subr.bf16.mxu0 %v377
    %1291 = vmatpush1.bf16.msra.mxu0 %v376
    %1292 = vmatprep.subr.bf16.mxu0 %v381
    %1293 = vmatpush1.bf16.msra.mxu0 %v380
    %1294 = vmatprep.subr.bf16.mxu0 %v385
    %1295 = vmatpush1.bf16.msra.mxu0 %v384
    %1296 = vmatprep.subr.bf16.mxu0 %v389
    %1297 = vmatpush1.bf16.msra.mxu0 %v388
    %1298 = vmatprep.subr.bf16.mxu0 %v393
    %1299 = vmatpush1.bf16.msra.mxu0 %v392
    %1300 = vmatprep.subr.bf16.mxu0 %v397
    %1301 = vmatpush1.bf16.msra.mxu0 %v396
    %1302 = vmatprep.subr.bf16.mxu0 %v401
    %1303 = vmatpush1.bf16.msra.mxu0 %v400
    %1304 = vmatprep.subr.bf16.mxu0 %v405
    %1305 = vmatpush1.bf16.msra.mxu0 %v404
    %1306 = vmatprep.mubr.bf16.mxu0 %v1232
    %1307 = vmatmul.mubr.bf16.gmra.mrb[0].mxu0 %v1231
    %v1308 = vpop.f32.mrb[0].mxu0
    %v1309 = vadd.f32 %v141, %v1308
    %v1310 = vpop.f32.mrb[0].mxu0
    %v1311 = vadd.f32 %v145, %v1310
    %v1312 = vpop.f32.mrb[0].mxu0
    %v1313 = vpop.f32.mrb[0].mxu0
    %1314 = vdwg.mxu0
    %v1315 = vxor.u32 %v1268, 2147483648
    %v1316 = vmul.f32 %v1315, 1.442695
    %v1317 = vpow.pop %v1316
    %v1318 = vadd.f32 %v1317, 1.0
    %v1319 = vrcp.pop %v1318
    %v1320 = vmul.f32 1.0, %v1319
    %v1321 = vxor.u32 %v1270, 2147483648
    %v1322 = vmul.f32 %v1321, 1.442695
    %v1323 = vpow.pop %v1322
    %v1324 = vadd.f32 %v1323, 1.0
    %v1325 = vrcp.pop %v1324
    %v1326 = vmul.f32 1.0, %v1325
    %v1327 = vtanh.pop %v1309
    %v1328 = vxor.u32 %v1311, 2147483648
    %v1329 = vmul.f32 %v1328, 1.442695
    %v1330 = vpow.pop %v1329
    %v1331 = vadd.f32 %v1330, 1.0
    %v1332 = vrcp.pop %v1331
    %v1333 = vmul.f32 1.0, %v1332
    %v1334 = vmul.f32 %v1326, %v1227
    %v1335 = vmul.f32 %v1320, %v1327
    %v1336 = vadd.f32 %v1334, %v1335
    %v1337 = vtanh.pop %v1336
    %v1338 = vmul.f32 %v1333, %v1337
    %v1339 = vpack.c.bf16 %v1338, %v1338
    %v1340 = vld [vmem:[#allocation7] sm:$0xf]
    %v1341 = vld [vmem:[#allocation7 + $0x4] sm:$0xf]
    %v1342 = vld [vmem:[#allocation7 + $0x8] sm:$0xf]
    %v1343 = vld [vmem:[#allocation7 + $0xc] sm:$0xf]
    %v1344 = vld [vmem:[#allocation7 + $0x10] sm:$0xf]
    %v1345 = vld [vmem:[#allocation7 + $0x14] sm:$0xf]
    %v1346 = vld [vmem:[#allocation7 + $0x18] sm:$0xf]
    %v1347 = vld [vmem:[#allocation7 + $0x1c] sm:$0xf]
    %v1348 = vld [vmem:[#allocation7 + $0x20] sm:$0xf]
    %v1349 = vld [vmem:[#allocation7 + $0x24] sm:$0xf]
    %v1350 = vld [vmem:[#allocation7 + $0x28] sm:$0xf]
    %v1351 = vld [vmem:[#allocation7 + $0x2c] sm:$0xf]
    %v1352 = vld [vmem:[#allocation7 + $0x30] sm:$0xf]
    %v1353 = vld [vmem:[#allocation7 + $0x34] sm:$0xf]
    %v1354 = vld [vmem:[#allocation7 + $0x38] sm:$0xf]
    %v1355 = vld [vmem:[#allocation7 + $0x3c] sm:$0xf]
    %v1356 = vld [vmem:[%s4] sm:$0x1]
    %v1358 = vlaneseq
    %v1359 = vshrl.u32 %v1358, 7
    %v1360 = vsub.s32 0, %v1359
    %v1361 = vrot.slane %v1356, %v1360
    %v1379 = vunpack.c.l.b16 %v1340
    %v1380 = vunpack.c.l.b16 %v1341
    %v1381 = vunpack.c.l.b16 %v1342
    %v1382 = vunpack.c.l.b16 %v1343
    %v1383 = vunpack.c.l.b16 %v1344
    %v1384 = vunpack.c.l.b16 %v1345
    %v1385 = vunpack.c.l.b16 %v1346
    %v1386 = vunpack.c.l.b16 %v1347
    %v1387 = vunpack.c.l.b16 %v1348
    %v1388 = vunpack.c.l.b16 %v1349
    %v1389 = vunpack.c.l.b16 %v1350
    %v1390 = vunpack.c.l.b16 %v1351
    %v1391 = vunpack.c.l.b16 %v1352
    %v1392 = vunpack.c.l.b16 %v1353
    %v1393 = vunpack.c.l.b16 %v1354
    %v1394 = vunpack.c.l.b16 %v1355
    %v1395 = vpack.c.b16 %v1380, %v1379
    %v1396 = vpack.c.b16 %v1382, %v1381
    %v1397 = vpack.c.b16 %v1384, %v1383
    %v1398 = vpack.c.b16 %v1386, %v1385
    %v1399 = vpack.c.b16 %v1388, %v1387
    %v1400 = vpack.c.b16 %v1390, %v1389
    %v1401 = vpack.c.b16 %v1392, %v1391
    %v1402 = vpack.c.b16 %v1394, %v1393
    %1411 = vmatprep.subr.bf16.mxu0 0
    %1412 = vmatpush1.bf16.msra.mxu0 %v1395
    %1413 = vmatprep.subr.bf16.mxu0 0
    %1414 = vmatpush1.bf16.msra.mxu0 %v1396
    %1415 = vmatprep.subr.bf16.mxu0 0
    %1416 = vmatpush1.bf16.msra.mxu0 %v1397
    %1417 = vmatprep.subr.bf16.mxu0 0
    %1418 = vmatpush1.bf16.msra.mxu0 %v1398
    %1419 = vmatprep.subr.bf16.mxu0 0
    %1420 = vmatpush1.bf16.msra.mxu0 %v1399
    %1421 = vmatprep.subr.bf16.mxu0 0
    %1422 = vmatpush1.bf16.msra.mxu0 %v1400
    %1423 = vmatprep.subr.bf16.mxu0 0
    %1424 = vmatpush1.bf16.msra.mxu0 %v1401
    %1425 = vmatprep.subr.bf16.mxu0 0
    %1426 = vmatpush1.bf16.msra.mxu0 %v1402
    %1427 = vmatprep.subr.bf16.mxu0 0
    %1428 = vmatpush1.bf16.msra.mxu0 0
    %1429 = vmatprep.subr.bf16.mxu0 0
    %1430 = vmatpush1.bf16.msra.mxu0 0
    %1431 = vmatprep.subr.bf16.mxu0 0
    %1432 = vmatpush1.bf16.msra.mxu0 0
    %1433 = vmatprep.subr.bf16.mxu0 0
    %1434 = vmatpush1.bf16.msra.mxu0 0
    %1435 = vmatprep.subr.bf16.mxu0 0
    %1436 = vmatpush1.bf16.msra.mxu0 0
    %1437 = vmatprep.subr.bf16.mxu0 0
    %1438 = vmatpush1.bf16.msra.mxu0 0
    %1439 = vmatprep.subr.bf16.mxu0 0
    %1440 = vmatpush1.bf16.msra.mxu0 0
    %1441 = vmatprep.subr.bf16.mxu0 0
    %1442 = vmatpush1.bf16.msra.mxu0 0
    %1443 = vmatprep.mubr.bf16.mxu0 0
    %1444 = vmatmul.mubr.bf16.gmra.mrb[0].mxu0 %v1339
    %v1445 = vpop.f32.mrb[0].mxu0
    %v1446 = vadd.f32 %v1361, %v1445
    %v1447 = vpop.f32.mrb[0].mxu0
    %v1448 = vpop.f32.mrb[0].mxu0
    %v1449 = vpop.f32.mrb[0].mxu0
    %1450 = vdwg.mxu0
    %1451 = vst [vmem:[#allocation8] sm:$0xff] %v1446
    // Predicated region
    $region34: #{tpu_custom_call.1} parent=1 // pred_check
      _
    $region35: #{tpu_custom_call.1} parent=1 // pred_check_branch
      %1453 = sbr.rel (0) target = $region37
    $region36: #{tpu_custom_call.1} parent=1 // pred_region
      %s1455 = ssub.s32 128, 128
      %1456 = vsyncadd [#allocation4], %s1455
      %s1458 = sshll.u32 [#allocation8], 4
      %s1459 = int_to_ptr.vmem [resolvable:$true] %s1458
      %1461 = dma.vmem_to_hbm [thread:$0]  %s1459, 128, %s5, [#allocation4]
    $region37: #{tpu_custom_call.1} parent=1 // pred_fallthru
      _
    // Predicated region
    $region38: #{tpu_custom_call.1} parent=1 // pred_check
      _
    $region39: #{tpu_custom_call.1} parent=1 // pred_check_branch
      %1463 = sbr.rel (0) target = $region41
    $region40: #{tpu_custom_call.1} parent=1 // pred_region
      %1464 = dma.done [#allocation4], 128
    $region41: #{tpu_custom_call.1} parent=1 // pred_fallthru
      _
    %1465 = vsyncpa [#allocation3], 1
    %1466 = vsyncpa [#allocation6], 1
    %1467 = vsyncpa [#allocation4], 1

</llo_original>
